<compile_context>
chip_gen: v5e
topology: v5e:2x2
jax: 0.10.0
libtpu: 0.0.40
codegen_flags: <defaults>
</compile_context>

<pallas_src>
import functools

import jax
import jax.numpy as jnp
from jax.experimental import pallas as pl
from jax.experimental.pallas import tpu as pltpu


def mha_kernel(x_ref, wqkv_ref, bqkv_ref, wp_ref, bp_ref, o_ref, heads_ref,
               *, num_heads, head_size):
    """One grid step = `block_b` batch elements.

    x_ref    : (Bb, T, C)
    wqkv_ref : (C, 3*H*hs)   bqkv_ref : (1, 3*H*hs)   (scale folded into Q part)
    wp_ref   : (H*hs, C)     bp_ref   : (1, C)
    o_ref    : (Bb, T, C)
    heads_ref: (Bb*T, H*hs)  VMEM scratch holding concatenated head outputs.
    """
    Bb, T, C = x_ref.shape
    H, hs = num_heads, head_size
    cdt = wqkv_ref.dtype                      # MXU operand dtype (f32 or bf16)
    exact_recip = jnp.dtype(cdt) == jnp.dtype(jnp.float32)

    # --- fused QKV projection for all heads & all batch rows in this block ---
    x2 = x_ref[...].reshape(Bb * T, C).astype(cdt)                 # (Bb*T, C)
    qkv = jnp.dot(x2, wqkv_ref[...],
                  preferred_element_type=jnp.float32) + bqkv_ref[...]
    # qkv column layout: [ q_h0 | ... | q_h{H-1} | k_h0.. | v_h0.. ]
    # (1/sqrt(hs) already folded into the Q columns by the wrapper.)

    # --- per (batch, head) attention; static unroll at these sizes ---
    for b in range(Bb):
        rows = slice(b * T, (b + 1) * T)
        for h in range(H):
            q = qkv[rows, h * hs:(h + 1) * hs].astype(cdt)               # (T, hs)
            k = qkv[rows, (H + h) * hs:(H + h + 1) * hs].astype(cdt)     # (T, hs)
            v = qkv[rows, (2 * H + h) * hs:(2 * H + h + 1) * hs].astype(cdt)

            # scores: contract over hs without materializing k.T
            s = jax.lax.dot_general(q, k, (((1,), (1,)), ((), ())),
                                    preferred_element_type=jnp.float32)  # (T, T)
            s = s - jnp.max(s, axis=-1, keepdims=True)
            p = jnp.exp(s)
            denom = jnp.sum(p, axis=-1, keepdims=True)
            # EUP reciprocal; exact on the f32 path so it matches the reference.
            p = p * pl.reciprocal(denom, approx=not exact_recip)

            pv = jnp.dot(p.astype(cdt), v,
                         preferred_element_type=jnp.float32)             # (T, hs)
            # Store at a static lane offset (replaces jnp.concatenate).
            heads_ref[b * T:(b + 1) * T, h * hs:(h + 1) * hs] = pv

    # --- output projection on the lane-dense concatenated head outputs ---
    cat = heads_ref[...].astype(wp_ref.dtype)                            # (Bb*T, H*hs)
    out = jnp.dot(cat, wp_ref[...],
                  preferred_element_type=jnp.float32) + bp_ref[...]      # (Bb*T, C)
    o_ref[...] = out.reshape(Bb, T, C).astype(o_ref.dtype)


def _pack_qkv(wq, bq, wk, bk, wv, bv):
    """Stack per-head (C, hs) weights into one lane-dense (C, 3*H*hs) operand.

    The 1/sqrt(head_size) attention scale is folded into the Q columns/bias.
    """
    H, C, hs = wq.shape
    scale = hs ** -0.5

    def flat_w(w):                              # (H, C, hs) -> (C, H*hs)
        return jnp.transpose(w, (1, 0, 2)).reshape(C, H * hs)

    def flat_b(b):                              # (H, 1, hs) -> (1, H*hs)
        return jnp.transpose(b, (1, 0, 2)).reshape(1, H * hs)

    w_qkv = jnp.concatenate([flat_w(wq) * scale, flat_w(wk), flat_w(wv)], axis=-1)
    b_qkv = jnp.concatenate([flat_b(bq) * scale, flat_b(bk), flat_b(bv)], axis=-1)
    return w_qkv, b_qkv


def multi_head_attention(x, wq, bq, wk, bk, wv, bv, wp, bp, *,
                         block_b=None, compute_dtype=jnp.float32):
    """Pallas MHA forward.  compute_dtype=jnp.bfloat16 recommended on v6e/v7x."""
    B, T, C = x.shape
    H, _, hs = wq.shape
    assert H * hs == wp.shape[0]
    out_dtype = x.dtype

    if block_b is None:
        block_b = min(B, next(d for d in (8, 4, 2, 1) if B % d == 0))
    assert B % block_b == 0, "block_b must divide the batch size"

    w_qkv, b_qkv = _pack_qkv(wq, bq, wk, bk, wv, bv)

    # MXU operands in compute_dtype; biases and accumulation stay f32.
    x_c = x.astype(compute_dtype)
    w_qkv = w_qkv.astype(compute_dtype)
    wp_c = wp.astype(compute_dtype)
    b_qkv = b_qkv.astype(jnp.float32)
    bp_c = bp.astype(jnp.float32)

    kernel = functools.partial(mha_kernel, num_heads=H, head_size=hs)

    return pl.pallas_call(
        kernel,
        out_shape=jax.ShapeDtypeStruct((B, T, C), out_dtype),
        grid_spec=pltpu.PrefetchScalarGridSpec(
            num_scalar_prefetch=0,
            grid=(B // block_b,),
            in_specs=[
                pl.BlockSpec((block_b, T, C), lambda i: (i, 0, 0)),   # x block
                pl.BlockSpec((C, 3 * H * hs), lambda i: (0, 0)),      # fused QKV W
                pl.BlockSpec((1, 3 * H * hs), lambda i: (0, 0)),      # fused QKV b
                pl.BlockSpec((H * hs, C), lambda i: (0, 0)),          # proj W
                pl.BlockSpec((1, C), lambda i: (0, 0)),               # proj b
            ],
            out_specs=pl.BlockSpec((block_b, T, C), lambda i: (i, 0, 0)),
            scratch_shapes=[pltpu.VMEM((block_b * T, H * hs), jnp.float32)],
        ),
        compiler_params=pltpu.CompilerParams(
            dimension_semantics=("parallel",)),
    )(x_c, w_qkv, b_qkv, wp_c, bp_c)


def reference_mha(x, wq, bq, wk, bk, wv, bv, wp, bp):
    """Pure-JAX reference mirroring the PyTorch forward (eval mode)."""
    H, C, hs = wq.shape
    outs = []
    for h in range(H):
        q = x @ wq[h] + bq[h]          # (B, T, hs)
        k = x @ wk[h] + bk[h]
        v = x @ wv[h] + bv[h]
        wei = jnp.einsum("btd,bsd->bts", q, k) * (hs ** -0.5)
        wei = jax.nn.softmax(wei, axis=-1)
        outs.append(jnp.einsum("bts,bsd->btd", wei, v))
    cat = jnp.concatenate(outs, axis=-1)
    return cat @ wp + bp[0]


if __name__ == "__main__":
    # Small shapes consistent with the module: n_embd = num_heads * head_size.
    B, T = 8, 8
    num_heads, head_size = 4, 8
    n_embd = num_heads * head_size      # 32

    key = jax.random.PRNGKey(0)
    keys = jax.random.split(key, 9)

    # Deterministic synthetic parameters (PyTorch-Linear-like uniform init).
    lim_in = 1.0 / (n_embd ** 0.5)
    lim_proj = 1.0 / ((num_heads * head_size) ** 0.5)

    wq = jax.random.uniform(keys[0], (num_heads, n_embd, head_size),
                            jnp.float32, -lim_in, lim_in)
    bq = jax.random.uniform(keys[1], (num_heads, 1, head_size),
                            jnp.float32, -lim_in, lim_in)
    wk = jax.random.uniform(keys[2], (num_heads, n_embd, head_size),
                            jnp.float32, -lim_in, lim_in)
    bk = jax.random.uniform(keys[3], (num_heads, 1, head_size),
                            jnp.float32, -lim_in, lim_in)
    wv = jax.random.uniform(keys[4], (num_heads, n_embd, head_size),
                            jnp.float32, -lim_in, lim_in)
    bv = jax.random.uniform(keys[5], (num_heads, 1, head_size),
                            jnp.float32, -lim_in, lim_in)
    wp = jax.random.uniform(keys[6], (num_heads * head_size, n_embd),
                            jnp.float32, -lim_proj, lim_proj)
    bp = jax.random.uniform(keys[7], (1, n_embd),
                            jnp.float32, -lim_proj, lim_proj)

    x = jax.random.normal(keys[8], (B, T, n_embd), jnp.float32)

    ref = reference_mha(x, wq, bq, wk, bk, wv, bv, wp, bp)

    # f32 MXU-operand path (exact; also the right choice on v5e).
    out = multi_head_attention(x, wq, bq, wk, bk, wv, bv, wp, bp, block_b=4)
    out = jax.block_until_ready(out)
    assert out.shape == (B, T, n_embd)
    assert jnp.allclose(out, ref, atol=1e-4, rtol=1e-4), "f32 kernel mismatch vs reference"

    # bf16 MXU-operand path (v6e/v7x fast path), f32 accumulation -> looser tol.
    out_bf16 = multi_head_attention(x, wq, bq, wk, bk, wv, bv, wp, bp,
                                    block_b=4, compute_dtype=jnp.bfloat16)
    out_bf16 = jax.block_until_ready(out_bf16)
    assert jnp.allclose(out_bf16, ref, atol=5e-2, rtol=5e-2), "bf16 kernel mismatch vs reference"

    print("KERNEL_OK")
</pallas_src>

<mosaic_0001>
module attributes {stable_mosaic.version = 11 : i64} {
  func.func @mha_kernel(%arg0: i32, %arg1: memref<4x8x32xf32, #tpu.memory_space<vmem>>, %arg2: memref<32x96xf32, #tpu.memory_space<vmem>>, %arg3: memref<1x96xf32, #tpu.memory_space<vmem>>, %arg4: memref<32x32xf32, #tpu.memory_space<vmem>>, %arg5: memref<1x32xf32, #tpu.memory_space<vmem>>, %arg6: memref<4x8x32xf32, #tpu.memory_space<vmem>>, %arg7: memref<32x32xf32, #tpu.memory_space<vmem>>) attributes {dimension_semantics = [#tpu.dimension_semantics<parallel>], iteration_bounds = array<i64: 2>, scalar_prefetch = 0 : i64, scratch_operands = 1 : i64, tpu.core_type = #tpu.core_type<tc>, window_params = [{transform_indices = @transform_0, window_bounds = array<i64: 4, 8, 32>}, {pipeline_mode = #tpu.pipeline_mode<synchronous>, transform_indices = @transform_1, window_bounds = array<i64: 32, 96>}, {pipeline_mode = #tpu.pipeline_mode<synchronous>, transform_indices = @transform_2, window_bounds = array<i64: 1, 96>}, {pipeline_mode = #tpu.pipeline_mode<synchronous>, transform_indices = @transform_3, window_bounds = array<i64: 32, 32>}, {pipeline_mode = #tpu.pipeline_mode<synchronous>, transform_indices = @transform_4, window_bounds = array<i64: 1, 32>}, {transform_indices = @transform_5, window_bounds = array<i64: 4, 8, 32>}]} {
    %c0 = arith.constant 0 : index
    %c0_0 = arith.constant 0 : index
    %c0_1 = arith.constant 0 : index
    %0 = vector.load %arg1[%c0, %c0_0, %c0_1] : memref<4x8x32xf32, #tpu.memory_space<vmem>>, vector<4x8x32xf32>
    %1 = vector.shape_cast %0 : vector<4x8x32xf32> to vector<32x32xf32>
    %c0_2 = arith.constant 0 : index
    %c0_3 = arith.constant 0 : index
    %2 = vector.load %arg2[%c0_2, %c0_3] : memref<32x96xf32, #tpu.memory_space<vmem>>, vector<32x96xf32>
    %cst = arith.constant dense<0.000000e+00> : vector<32x96xf32>
    %3 = tpu.matmul %1, %2, %cst {dimension_numbers = #tpu.dot_dimension_numbers<[1], [0], [0], [1], [0, 0, 1, 1], [], []>} : vector<32x32xf32>, vector<32x96xf32>, vector<32x96xf32> -> vector<32x96xf32>
    %c0_4 = arith.constant 0 : index
    %c0_5 = arith.constant 0 : index
    %4 = vector.load %arg3[%c0_4, %c0_5] : memref<1x96xf32, #tpu.memory_space<vmem>>, vector<1x96xf32>
    %5 = vector.broadcast %4 : vector<1x96xf32> to vector<32x96xf32>
    %6 = arith.addf %3, %5 : vector<32x96xf32>
    %7 = vector.extract_strided_slice %6 {offsets = [0, 0], sizes = [8, 8], strides = [1, 1]} : vector<32x96xf32> to vector<8x8xf32>
    %8 = vector.extract_strided_slice %6 {offsets = [0, 32], sizes = [8, 8], strides = [1, 1]} : vector<32x96xf32> to vector<8x8xf32>
    %9 = vector.extract_strided_slice %6 {offsets = [0, 64], sizes = [8, 8], strides = [1, 1]} : vector<32x96xf32> to vector<8x8xf32>
    %cst_6 = arith.constant dense<0.000000e+00> : vector<8x8xf32>
    %10 = tpu.matmul %7, %8, %cst_6 {dimension_numbers = #tpu.dot_dimension_numbers<[1], [1], [0], [0], [0, 0, 1, 0], [], []>} : vector<8x8xf32>, vector<8x8xf32>, vector<8x8xf32> -> vector<8x8xf32>
    %cst_7 = arith.constant dense<0xFF800000> : vector<8xf32>
    %11 = vector.multi_reduction <maximumf>, %10, %cst_7 [1] : vector<8x8xf32> to vector<8xf32>
    %12 = vector.shape_cast %11 : vector<8xf32> to vector<8x1xf32>
    %13 = vector.broadcast %12 : vector<8x1xf32> to vector<8x8xf32>
    %14 = arith.subf %10, %13 : vector<8x8xf32>
    %15 = math.exp %14 : vector<8x8xf32>
    %cst_8 = arith.constant dense<0.000000e+00> : vector<8xf32>
    %16 = vector.multi_reduction <add>, %15, %cst_8 [1] : vector<8x8xf32> to vector<8xf32>
    %17 = vector.shape_cast %16 : vector<8xf32> to vector<8x1xf32>
    %18 = tpu.reciprocal %17 : vector<8x1xf32> -> vector<8x1xf32>
    %19 = vector.broadcast %18 : vector<8x1xf32> to vector<8x8xf32>
    %20 = arith.mulf %15, %19 : vector<8x8xf32>
    %cst_9 = arith.constant dense<0.000000e+00> : vector<8x8xf32>
    %21 = tpu.matmul %20, %9, %cst_9 {dimension_numbers = #tpu.dot_dimension_numbers<[1], [0], [0], [1], [0, 0, 1, 1], [], []>} : vector<8x8xf32>, vector<8x8xf32>, vector<8x8xf32> -> vector<8x8xf32>
    %c0_10 = arith.constant 0 : index
    %c0_11 = arith.constant 0 : index
    %22 = vector.load %arg7[%c0_10, %c0_11] : memref<32x32xf32, #tpu.memory_space<vmem>>, vector<8x8xf32>
    tpu.vector_store %arg7[%c0_10, %c0_11], %21 {strides = array<i32>} : memref<32x32xf32, #tpu.memory_space<vmem>>, vector<8x8xf32>,
    %23 = vector.extract_strided_slice %6 {offsets = [0, 8], sizes = [8, 8], strides = [1, 1]} : vector<32x96xf32> to vector<8x8xf32>
    %24 = vector.extract_strided_slice %6 {offsets = [0, 40], sizes = [8, 8], strides = [1, 1]} : vector<32x96xf32> to vector<8x8xf32>
    %25 = vector.extract_strided_slice %6 {offsets = [0, 72], sizes = [8, 8], strides = [1, 1]} : vector<32x96xf32> to vector<8x8xf32>
    %cst_12 = arith.constant dense<0.000000e+00> : vector<8x8xf32>
    %26 = tpu.matmul %23, %24, %cst_12 {dimension_numbers = #tpu.dot_dimension_numbers<[1], [1], [0], [0], [0, 0, 1, 0], [], []>} : vector<8x8xf32>, vector<8x8xf32>, vector<8x8xf32> -> vector<8x8xf32>
    %cst_13 = arith.constant dense<0xFF800000> : vector<8xf32>
    %27 = vector.multi_reduction <maximumf>, %26, %cst_13 [1] : vector<8x8xf32> to vector<8xf32>
    %28 = vector.shape_cast %27 : vector<8xf32> to vector<8x1xf32>
    %29 = vector.broadcast %28 : vector<8x1xf32> to vector<8x8xf32>
    %30 = arith.subf %26, %29 : vector<8x8xf32>
    %31 = math.exp %30 : vector<8x8xf32>
    %cst_14 = arith.constant dense<0.000000e+00> : vector<8xf32>
    %32 = vector.multi_reduction <add>, %31, %cst_14 [1] : vector<8x8xf32> to vector<8xf32>
    %33 = vector.shape_cast %32 : vector<8xf32> to vector<8x1xf32>
    %34 = tpu.reciprocal %33 : vector<8x1xf32> -> vector<8x1xf32>
    %35 = vector.broadcast %34 : vector<8x1xf32> to vector<8x8xf32>
    %36 = arith.mulf %31, %35 : vector<8x8xf32>
    %cst_15 = arith.constant dense<0.000000e+00> : vector<8x8xf32>
    %37 = tpu.matmul %36, %25, %cst_15 {dimension_numbers = #tpu.dot_dimension_numbers<[1], [0], [0], [1], [0, 0, 1, 1], [], []>} : vector<8x8xf32>, vector<8x8xf32>, vector<8x8xf32> -> vector<8x8xf32>
    %c0_16 = arith.constant 0 : index
    %c8 = arith.constant 8 : index
    %38 = vector.load %arg7[%c0_16, %c8] : memref<32x32xf32, #tpu.memory_space<vmem>>, vector<8x8xf32>
    tpu.vector_store %arg7[%c0_16, %c8], %37 {strides = array<i32>} : memref<32x32xf32, #tpu.memory_space<vmem>>, vector<8x8xf32>,
    %39 = vector.extract_strided_slice %6 {offsets = [0, 16], sizes = [8, 8], strides = [1, 1]} : vector<32x96xf32> to vector<8x8xf32>
    %40 = vector.extract_strided_slice %6 {offsets = [0, 48], sizes = [8, 8], strides = [1, 1]} : vector<32x96xf32> to vector<8x8xf32>
    %41 = vector.extract_strided_slice %6 {offsets = [0, 80], sizes = [8, 8], strides = [1, 1]} : vector<32x96xf32> to vector<8x8xf32>
    %cst_17 = arith.constant dense<0.000000e+00> : vector<8x8xf32>
    %42 = tpu.matmul %39, %40, %cst_17 {dimension_numbers = #tpu.dot_dimension_numbers<[1], [1], [0], [0], [0, 0, 1, 0], [], []>} : vector<8x8xf32>, vector<8x8xf32>, vector<8x8xf32> -> vector<8x8xf32>
    %cst_18 = arith.constant dense<0xFF800000> : vector<8xf32>
    %43 = vector.multi_reduction <maximumf>, %42, %cst_18 [1] : vector<8x8xf32> to vector<8xf32>
    %44 = vector.shape_cast %43 : vector<8xf32> to vector<8x1xf32>
    %45 = vector.broadcast %44 : vector<8x1xf32> to vector<8x8xf32>
    %46 = arith.subf %42, %45 : vector<8x8xf32>
    %47 = math.exp %46 : vector<8x8xf32>
    %cst_19 = arith.constant dense<0.000000e+00> : vector<8xf32>
    %48 = vector.multi_reduction <add>, %47, %cst_19 [1] : vector<8x8xf32> to vector<8xf32>
    %49 = vector.shape_cast %48 : vector<8xf32> to vector<8x1xf32>
    %50 = tpu.reciprocal %49 : vector<8x1xf32> -> vector<8x1xf32>
    %51 = vector.broadcast %50 : vector<8x1xf32> to vector<8x8xf32>
    %52 = arith.mulf %47, %51 : vector<8x8xf32>
    %cst_20 = arith.constant dense<0.000000e+00> : vector<8x8xf32>
    %53 = tpu.matmul %52, %41, %cst_20 {dimension_numbers = #tpu.dot_dimension_numbers<[1], [0], [0], [1], [0, 0, 1, 1], [], []>} : vector<8x8xf32>, vector<8x8xf32>, vector<8x8xf32> -> vector<8x8xf32>
    %c0_21 = arith.constant 0 : index
    %c16 = arith.constant 16 : index
    %54 = vector.load %arg7[%c0_21, %c16] : memref<32x32xf32, #tpu.memory_space<vmem>>, vector<8x8xf32>
    tpu.vector_store %arg7[%c0_21, %c16], %53 {strides = array<i32>} : memref<32x32xf32, #tpu.memory_space<vmem>>, vector<8x8xf32>,
    %55 = vector.extract_strided_slice %6 {offsets = [0, 24], sizes = [8, 8], strides = [1, 1]} : vector<32x96xf32> to vector<8x8xf32>
    %56 = vector.extract_strided_slice %6 {offsets = [0, 56], sizes = [8, 8], strides = [1, 1]} : vector<32x96xf32> to vector<8x8xf32>
    %57 = vector.extract_strided_slice %6 {offsets = [0, 88], sizes = [8, 8], strides = [1, 1]} : vector<32x96xf32> to vector<8x8xf32>
    %cst_22 = arith.constant dense<0.000000e+00> : vector<8x8xf32>
    %58 = tpu.matmul %55, %56, %cst_22 {dimension_numbers = #tpu.dot_dimension_numbers<[1], [1], [0], [0], [0, 0, 1, 0], [], []>} : vector<8x8xf32>, vector<8x8xf32>, vector<8x8xf32> -> vector<8x8xf32>
    %cst_23 = arith.constant dense<0xFF800000> : vector<8xf32>
    %59 = vector.multi_reduction <maximumf>, %58, %cst_23 [1] : vector<8x8xf32> to vector<8xf32>
    %60 = vector.shape_cast %59 : vector<8xf32> to vector<8x1xf32>
    %61 = vector.broadcast %60 : vector<8x1xf32> to vector<8x8xf32>
    %62 = arith.subf %58, %61 : vector<8x8xf32>
    %63 = math.exp %62 : vector<8x8xf32>
    %cst_24 = arith.constant dense<0.000000e+00> : vector<8xf32>
    %64 = vector.multi_reduction <add>, %63, %cst_24 [1] : vector<8x8xf32> to vector<8xf32>
    %65 = vector.shape_cast %64 : vector<8xf32> to vector<8x1xf32>
    %66 = tpu.reciprocal %65 : vector<8x1xf32> -> vector<8x1xf32>
    %67 = vector.broadcast %66 : vector<8x1xf32> to vector<8x8xf32>
    %68 = arith.mulf %63, %67 : vector<8x8xf32>
    %cst_25 = arith.constant dense<0.000000e+00> : vector<8x8xf32>
    %69 = tpu.matmul %68, %57, %cst_25 {dimension_numbers = #tpu.dot_dimension_numbers<[1], [0], [0], [1], [0, 0, 1, 1], [], []>} : vector<8x8xf32>, vector<8x8xf32>, vector<8x8xf32> -> vector<8x8xf32>
    %c0_26 = arith.constant 0 : index
    %c24 = arith.constant 24 : index
    %70 = vector.load %arg7[%c0_26, %c24] : memref<32x32xf32, #tpu.memory_space<vmem>>, vector<8x8xf32>
    tpu.vector_store %arg7[%c0_26, %c24], %69 {strides = array<i32>} : memref<32x32xf32, #tpu.memory_space<vmem>>, vector<8x8xf32>,
    %71 = vector.extract_strided_slice %6 {offsets = [8, 0], sizes = [8, 8], strides = [1, 1]} : vector<32x96xf32> to vector<8x8xf32>
    %72 = vector.extract_strided_slice %6 {offsets = [8, 32], sizes = [8, 8], strides = [1, 1]} : vector<32x96xf32> to vector<8x8xf32>
    %73 = vector.extract_strided_slice %6 {offsets = [8, 64], sizes = [8, 8], strides = [1, 1]} : vector<32x96xf32> to vector<8x8xf32>
    %cst_27 = arith.constant dense<0.000000e+00> : vector<8x8xf32>
    %74 = tpu.matmul %71, %72, %cst_27 {dimension_numbers = #tpu.dot_dimension_numbers<[1], [1], [0], [0], [0, 0, 1, 0], [], []>} : vector<8x8xf32>, vector<8x8xf32>, vector<8x8xf32> -> vector<8x8xf32>
    %cst_28 = arith.constant dense<0xFF800000> : vector<8xf32>
    %75 = vector.multi_reduction <maximumf>, %74, %cst_28 [1] : vector<8x8xf32> to vector<8xf32>
    %76 = vector.shape_cast %75 : vector<8xf32> to vector<8x1xf32>
    %77 = vector.broadcast %76 : vector<8x1xf32> to vector<8x8xf32>
    %78 = arith.subf %74, %77 : vector<8x8xf32>
    %79 = math.exp %78 : vector<8x8xf32>
    %cst_29 = arith.constant dense<0.000000e+00> : vector<8xf32>
    %80 = vector.multi_reduction <add>, %79, %cst_29 [1] : vector<8x8xf32> to vector<8xf32>
    %81 = vector.shape_cast %80 : vector<8xf32> to vector<8x1xf32>
    %82 = tpu.reciprocal %81 : vector<8x1xf32> -> vector<8x1xf32>
    %83 = vector.broadcast %82 : vector<8x1xf32> to vector<8x8xf32>
    %84 = arith.mulf %79, %83 : vector<8x8xf32>
    %cst_30 = arith.constant dense<0.000000e+00> : vector<8x8xf32>
    %85 = tpu.matmul %84, %73, %cst_30 {dimension_numbers = #tpu.dot_dimension_numbers<[1], [0], [0], [1], [0, 0, 1, 1], [], []>} : vector<8x8xf32>, vector<8x8xf32>, vector<8x8xf32> -> vector<8x8xf32>
    %c8_31 = arith.constant 8 : index
    %c0_32 = arith.constant 0 : index
    %86 = vector.load %arg7[%c8_31, %c0_32] : memref<32x32xf32, #tpu.memory_space<vmem>>, vector<8x8xf32>
    tpu.vector_store %arg7[%c8_31, %c0_32], %85 {strides = array<i32>} : memref<32x32xf32, #tpu.memory_space<vmem>>, vector<8x8xf32>,
    %87 = vector.extract_strided_slice %6 {offsets = [8, 8], sizes = [8, 8], strides = [1, 1]} : vector<32x96xf32> to vector<8x8xf32>
    %88 = vector.extract_strided_slice %6 {offsets = [8, 40], sizes = [8, 8], strides = [1, 1]} : vector<32x96xf32> to vector<8x8xf32>
    %89 = vector.extract_strided_slice %6 {offsets = [8, 72], sizes = [8, 8], strides = [1, 1]} : vector<32x96xf32> to vector<8x8xf32>
    %cst_33 = arith.constant dense<0.000000e+00> : vector<8x8xf32>
    %90 = tpu.matmul %87, %88, %cst_33 {dimension_numbers = #tpu.dot_dimension_numbers<[1], [1], [0], [0], [0, 0, 1, 0], [], []>} : vector<8x8xf32>, vector<8x8xf32>, vector<8x8xf32> -> vector<8x8xf32>
    %cst_34 = arith.constant dense<0xFF800000> : vector<8xf32>
    %91 = vector.multi_reduction <maximumf>, %90, %cst_34 [1] : vector<8x8xf32> to vector<8xf32>
    %92 = vector.shape_cast %91 : vector<8xf32> to vector<8x1xf32>
    %93 = vector.broadcast %92 : vector<8x1xf32> to vector<8x8xf32>
    %94 = arith.subf %90, %93 : vector<8x8xf32>
    %95 = math.exp %94 : vector<8x8xf32>
    %cst_35 = arith.constant dense<0.000000e+00> : vector<8xf32>
    %96 = vector.multi_reduction <add>, %95, %cst_35 [1] : vector<8x8xf32> to vector<8xf32>
    %97 = vector.shape_cast %96 : vector<8xf32> to vector<8x1xf32>
    %98 = tpu.reciprocal %97 : vector<8x1xf32> -> vector<8x1xf32>
    %99 = vector.broadcast %98 : vector<8x1xf32> to vector<8x8xf32>
    %100 = arith.mulf %95, %99 : vector<8x8xf32>
    %cst_36 = arith.constant dense<0.000000e+00> : vector<8x8xf32>
    %101 = tpu.matmul %100, %89, %cst_36 {dimension_numbers = #tpu.dot_dimension_numbers<[1], [0], [0], [1], [0, 0, 1, 1], [], []>} : vector<8x8xf32>, vector<8x8xf32>, vector<8x8xf32> -> vector<8x8xf32>
    %c8_37 = arith.constant 8 : index
    %c8_38 = arith.constant 8 : index
    %102 = vector.load %arg7[%c8_37, %c8_38] : memref<32x32xf32, #tpu.memory_space<vmem>>, vector<8x8xf32>
    tpu.vector_store %arg7[%c8_37, %c8_38], %101 {strides = array<i32>} : memref<32x32xf32, #tpu.memory_space<vmem>>, vector<8x8xf32>,
    %103 = vector.extract_strided_slice %6 {offsets = [8, 16], sizes = [8, 8], strides = [1, 1]} : vector<32x96xf32> to vector<8x8xf32>
    %104 = vector.extract_strided_slice %6 {offsets = [8, 48], sizes = [8, 8], strides = [1, 1]} : vector<32x96xf32> to vector<8x8xf32>
    %105 = vector.extract_strided_slice %6 {offsets = [8, 80], sizes = [8, 8], strides = [1, 1]} : vector<32x96xf32> to vector<8x8xf32>
    %cst_39 = arith.constant dense<0.000000e+00> : vector<8x8xf32>
    %106 = tpu.matmul %103, %104, %cst_39 {dimension_numbers = #tpu.dot_dimension_numbers<[1], [1], [0], [0], [0, 0, 1, 0], [], []>} : vector<8x8xf32>, vector<8x8xf32>, vector<8x8xf32> -> vector<8x8xf32>
    %cst_40 = arith.constant dense<0xFF800000> : vector<8xf32>
    %107 = vector.multi_reduction <maximumf>, %106, %cst_40 [1] : vector<8x8xf32> to vector<8xf32>
    %108 = vector.shape_cast %107 : vector<8xf32> to vector<8x1xf32>
    %109 = vector.broadcast %108 : vector<8x1xf32> to vector<8x8xf32>
    %110 = arith.subf %106, %109 : vector<8x8xf32>
    %111 = math.exp %110 : vector<8x8xf32>
    %cst_41 = arith.constant dense<0.000000e+00> : vector<8xf32>
    %112 = vector.multi_reduction <add>, %111, %cst_41 [1] : vector<8x8xf32> to vector<8xf32>
    %113 = vector.shape_cast %112 : vector<8xf32> to vector<8x1xf32>
    %114 = tpu.reciprocal %113 : vector<8x1xf32> -> vector<8x1xf32>
    %115 = vector.broadcast %114 : vector<8x1xf32> to vector<8x8xf32>
    %116 = arith.mulf %111, %115 : vector<8x8xf32>
    %cst_42 = arith.constant dense<0.000000e+00> : vector<8x8xf32>
    %117 = tpu.matmul %116, %105, %cst_42 {dimension_numbers = #tpu.dot_dimension_numbers<[1], [0], [0], [1], [0, 0, 1, 1], [], []>} : vector<8x8xf32>, vector<8x8xf32>, vector<8x8xf32> -> vector<8x8xf32>
    %c8_43 = arith.constant 8 : index
    %c16_44 = arith.constant 16 : index
    %118 = vector.load %arg7[%c8_43, %c16_44] : memref<32x32xf32, #tpu.memory_space<vmem>>, vector<8x8xf32>
    tpu.vector_store %arg7[%c8_43, %c16_44], %117 {strides = array<i32>} : memref<32x32xf32, #tpu.memory_space<vmem>>, vector<8x8xf32>,
    %119 = vector.extract_strided_slice %6 {offsets = [8, 24], sizes = [8, 8], strides = [1, 1]} : vector<32x96xf32> to vector<8x8xf32>
    %120 = vector.extract_strided_slice %6 {offsets = [8, 56], sizes = [8, 8], strides = [1, 1]} : vector<32x96xf32> to vector<8x8xf32>
    %121 = vector.extract_strided_slice %6 {offsets = [8, 88], sizes = [8, 8], strides = [1, 1]} : vector<32x96xf32> to vector<8x8xf32>
    %cst_45 = arith.constant dense<0.000000e+00> : vector<8x8xf32>
    %122 = tpu.matmul %119, %120, %cst_45 {dimension_numbers = #tpu.dot_dimension_numbers<[1], [1], [0], [0], [0, 0, 1, 0], [], []>} : vector<8x8xf32>, vector<8x8xf32>, vector<8x8xf32> -> vector<8x8xf32>
    %cst_46 = arith.constant dense<0xFF800000> : vector<8xf32>
    %123 = vector.multi_reduction <maximumf>, %122, %cst_46 [1] : vector<8x8xf32> to vector<8xf32>
    %124 = vector.shape_cast %123 : vector<8xf32> to vector<8x1xf32>
    %125 = vector.broadcast %124 : vector<8x1xf32> to vector<8x8xf32>
    %126 = arith.subf %122, %125 : vector<8x8xf32>
    %127 = math.exp %126 : vector<8x8xf32>
    %cst_47 = arith.constant dense<0.000000e+00> : vector<8xf32>
    %128 = vector.multi_reduction <add>, %127, %cst_47 [1] : vector<8x8xf32> to vector<8xf32>
    %129 = vector.shape_cast %128 : vector<8xf32> to vector<8x1xf32>
    %130 = tpu.reciprocal %129 : vector<8x1xf32> -> vector<8x1xf32>
    %131 = vector.broadcast %130 : vector<8x1xf32> to vector<8x8xf32>
    %132 = arith.mulf %127, %131 : vector<8x8xf32>
    %cst_48 = arith.constant dense<0.000000e+00> : vector<8x8xf32>
    %133 = tpu.matmul %132, %121, %cst_48 {dimension_numbers = #tpu.dot_dimension_numbers<[1], [0], [0], [1], [0, 0, 1, 1], [], []>} : vector<8x8xf32>, vector<8x8xf32>, vector<8x8xf32> -> vector<8x8xf32>
    %c8_49 = arith.constant 8 : index
    %c24_50 = arith.constant 24 : index
    %134 = vector.load %arg7[%c8_49, %c24_50] : memref<32x32xf32, #tpu.memory_space<vmem>>, vector<8x8xf32>
    tpu.vector_store %arg7[%c8_49, %c24_50], %133 {strides = array<i32>} : memref<32x32xf32, #tpu.memory_space<vmem>>, vector<8x8xf32>,
    %135 = vector.extract_strided_slice %6 {offsets = [16, 0], sizes = [8, 8], strides = [1, 1]} : vector<32x96xf32> to vector<8x8xf32>
    %136 = vector.extract_strided_slice %6 {offsets = [16, 32], sizes = [8, 8], strides = [1, 1]} : vector<32x96xf32> to vector<8x8xf32>
    %137 = vector.extract_strided_slice %6 {offsets = [16, 64], sizes = [8, 8], strides = [1, 1]} : vector<32x96xf32> to vector<8x8xf32>
    %cst_51 = arith.constant dense<0.000000e+00> : vector<8x8xf32>
    %138 = tpu.matmul %135, %136, %cst_51 {dimension_numbers = #tpu.dot_dimension_numbers<[1], [1], [0], [0], [0, 0, 1, 0], [], []>} : vector<8x8xf32>, vector<8x8xf32>, vector<8x8xf32> -> vector<8x8xf32>
    %cst_52 = arith.constant dense<0xFF800000> : vector<8xf32>
    %139 = vector.multi_reduction <maximumf>, %138, %cst_52 [1] : vector<8x8xf32> to vector<8xf32>
    %140 = vector.shape_cast %139 : vector<8xf32> to vector<8x1xf32>
    %141 = vector.broadcast %140 : vector<8x1xf32> to vector<8x8xf32>
    %142 = arith.subf %138, %141 : vector<8x8xf32>
    %143 = math.exp %142 : vector<8x8xf32>
    %cst_53 = arith.constant dense<0.000000e+00> : vector<8xf32>
    %144 = vector.multi_reduction <add>, %143, %cst_53 [1] : vector<8x8xf32> to vector<8xf32>
    %145 = vector.shape_cast %144 : vector<8xf32> to vector<8x1xf32>
    %146 = tpu.reciprocal %145 : vector<8x1xf32> -> vector<8x1xf32>
    %147 = vector.broadcast %146 : vector<8x1xf32> to vector<8x8xf32>
    %148 = arith.mulf %143, %147 : vector<8x8xf32>
    %cst_54 = arith.constant dense<0.000000e+00> : vector<8x8xf32>
    %149 = tpu.matmul %148, %137, %cst_54 {dimension_numbers = #tpu.dot_dimension_numbers<[1], [0], [0], [1], [0, 0, 1, 1], [], []>} : vector<8x8xf32>, vector<8x8xf32>, vector<8x8xf32> -> vector<8x8xf32>
    %c16_55 = arith.constant 16 : index
    %c0_56 = arith.constant 0 : index
    %150 = vector.load %arg7[%c16_55, %c0_56] : memref<32x32xf32, #tpu.memory_space<vmem>>, vector<8x8xf32>
    tpu.vector_store %arg7[%c16_55, %c0_56], %149 {strides = array<i32>} : memref<32x32xf32, #tpu.memory_space<vmem>>, vector<8x8xf32>,
    %151 = vector.extract_strided_slice %6 {offsets = [16, 8], sizes = [8, 8], strides = [1, 1]} : vector<32x96xf32> to vector<8x8xf32>
    %152 = vector.extract_strided_slice %6 {offsets = [16, 40], sizes = [8, 8], strides = [1, 1]} : vector<32x96xf32> to vector<8x8xf32>
    %153 = vector.extract_strided_slice %6 {offsets = [16, 72], sizes = [8, 8], strides = [1, 1]} : vector<32x96xf32> to vector<8x8xf32>
    %cst_57 = arith.constant dense<0.000000e+00> : vector<8x8xf32>
    %154 = tpu.matmul %151, %152, %cst_57 {dimension_numbers = #tpu.dot_dimension_numbers<[1], [1], [0], [0], [0, 0, 1, 0], [], []>} : vector<8x8xf32>, vector<8x8xf32>, vector<8x8xf32> -> vector<8x8xf32>
    %cst_58 = arith.constant dense<0xFF800000> : vector<8xf32>
    %155 = vector.multi_reduction <maximumf>, %154, %cst_58 [1] : vector<8x8xf32> to vector<8xf32>
    %156 = vector.shape_cast %155 : vector<8xf32> to vector<8x1xf32>
    %157 = vector.broadcast %156 : vector<8x1xf32> to vector<8x8xf32>
    %158 = arith.subf %154, %157 : vector<8x8xf32>
    %159 = math.exp %158 : vector<8x8xf32>
    %cst_59 = arith.constant dense<0.000000e+00> : vector<8xf32>
    %160 = vector.multi_reduction <add>, %159, %cst_59 [1] : vector<8x8xf32> to vector<8xf32>
    %161 = vector.shape_cast %160 : vector<8xf32> to vector<8x1xf32>
    %162 = tpu.reciprocal %161 : vector<8x1xf32> -> vector<8x1xf32>
    %163 = vector.broadcast %162 : vector<8x1xf32> to vector<8x8xf32>
    %164 = arith.mulf %159, %163 : vector<8x8xf32>
    %cst_60 = arith.constant dense<0.000000e+00> : vector<8x8xf32>
    %165 = tpu.matmul %164, %153, %cst_60 {dimension_numbers = #tpu.dot_dimension_numbers<[1], [0], [0], [1], [0, 0, 1, 1], [], []>} : vector<8x8xf32>, vector<8x8xf32>, vector<8x8xf32> -> vector<8x8xf32>
    %c16_61 = arith.constant 16 : index
    %c8_62 = arith.constant 8 : index
    %166 = vector.load %arg7[%c16_61, %c8_62] : memref<32x32xf32, #tpu.memory_space<vmem>>, vector<8x8xf32>
    tpu.vector_store %arg7[%c16_61, %c8_62], %165 {strides = array<i32>} : memref<32x32xf32, #tpu.memory_space<vmem>>, vector<8x8xf32>,
    %167 = vector.extract_strided_slice %6 {offsets = [16, 16], sizes = [8, 8], strides = [1, 1]} : vector<32x96xf32> to vector<8x8xf32>
    %168 = vector.extract_strided_slice %6 {offsets = [16, 48], sizes = [8, 8], strides = [1, 1]} : vector<32x96xf32> to vector<8x8xf32>
    %169 = vector.extract_strided_slice %6 {offsets = [16, 80], sizes = [8, 8], strides = [1, 1]} : vector<32x96xf32> to vector<8x8xf32>
    %cst_63 = arith.constant dense<0.000000e+00> : vector<8x8xf32>
    %170 = tpu.matmul %167, %168, %cst_63 {dimension_numbers = #tpu.dot_dimension_numbers<[1], [1], [0], [0], [0, 0, 1, 0], [], []>} : vector<8x8xf32>, vector<8x8xf32>, vector<8x8xf32> -> vector<8x8xf32>
    %cst_64 = arith.constant dense<0xFF800000> : vector<8xf32>
    %171 = vector.multi_reduction <maximumf>, %170, %cst_64 [1] : vector<8x8xf32> to vector<8xf32>
    %172 = vector.shape_cast %171 : vector<8xf32> to vector<8x1xf32>
    %173 = vector.broadcast %172 : vector<8x1xf32> to vector<8x8xf32>
    %174 = arith.subf %170, %173 : vector<8x8xf32>
    %175 = math.exp %174 : vector<8x8xf32>
    %cst_65 = arith.constant dense<0.000000e+00> : vector<8xf32>
    %176 = vector.multi_reduction <add>, %175, %cst_65 [1] : vector<8x8xf32> to vector<8xf32>
    %177 = vector.shape_cast %176 : vector<8xf32> to vector<8x1xf32>
    %178 = tpu.reciprocal %177 : vector<8x1xf32> -> vector<8x1xf32>
    %179 = vector.broadcast %178 : vector<8x1xf32> to vector<8x8xf32>
    %180 = arith.mulf %175, %179 : vector<8x8xf32>
    %cst_66 = arith.constant dense<0.000000e+00> : vector<8x8xf32>
    %181 = tpu.matmul %180, %169, %cst_66 {dimension_numbers = #tpu.dot_dimension_numbers<[1], [0], [0], [1], [0, 0, 1, 1], [], []>} : vector<8x8xf32>, vector<8x8xf32>, vector<8x8xf32> -> vector<8x8xf32>
    %c16_67 = arith.constant 16 : index
    %c16_68 = arith.constant 16 : index
    %182 = vector.load %arg7[%c16_67, %c16_68] : memref<32x32xf32, #tpu.memory_space<vmem>>, vector<8x8xf32>
    tpu.vector_store %arg7[%c16_67, %c16_68], %181 {strides = array<i32>} : memref<32x32xf32, #tpu.memory_space<vmem>>, vector<8x8xf32>,
    %183 = vector.extract_strided_slice %6 {offsets = [16, 24], sizes = [8, 8], strides = [1, 1]} : vector<32x96xf32> to vector<8x8xf32>
    %184 = vector.extract_strided_slice %6 {offsets = [16, 56], sizes = [8, 8], strides = [1, 1]} : vector<32x96xf32> to vector<8x8xf32>
    %185 = vector.extract_strided_slice %6 {offsets = [16, 88], sizes = [8, 8], strides = [1, 1]} : vector<32x96xf32> to vector<8x8xf32>
    %cst_69 = arith.constant dense<0.000000e+00> : vector<8x8xf32>
    %186 = tpu.matmul %183, %184, %cst_69 {dimension_numbers = #tpu.dot_dimension_numbers<[1], [1], [0], [0], [0, 0, 1, 0], [], []>} : vector<8x8xf32>, vector<8x8xf32>, vector<8x8xf32> -> vector<8x8xf32>
    %cst_70 = arith.constant dense<0xFF800000> : vector<8xf32>
    %187 = vector.multi_reduction <maximumf>, %186, %cst_70 [1] : vector<8x8xf32> to vector<8xf32>
    %188 = vector.shape_cast %187 : vector<8xf32> to vector<8x1xf32>
    %189 = vector.broadcast %188 : vector<8x1xf32> to vector<8x8xf32>
    %190 = arith.subf %186, %189 : vector<8x8xf32>
    %191 = math.exp %190 : vector<8x8xf32>
    %cst_71 = arith.constant dense<0.000000e+00> : vector<8xf32>
    %192 = vector.multi_reduction <add>, %191, %cst_71 [1] : vector<8x8xf32> to vector<8xf32>
    %193 = vector.shape_cast %192 : vector<8xf32> to vector<8x1xf32>
    %194 = tpu.reciprocal %193 : vector<8x1xf32> -> vector<8x1xf32>
    %195 = vector.broadcast %194 : vector<8x1xf32> to vector<8x8xf32>
    %196 = arith.mulf %191, %195 : vector<8x8xf32>
    %cst_72 = arith.constant dense<0.000000e+00> : vector<8x8xf32>
    %197 = tpu.matmul %196, %185, %cst_72 {dimension_numbers = #tpu.dot_dimension_numbers<[1], [0], [0], [1], [0, 0, 1, 1], [], []>} : vector<8x8xf32>, vector<8x8xf32>, vector<8x8xf32> -> vector<8x8xf32>
    %c16_73 = arith.constant 16 : index
    %c24_74 = arith.constant 24 : index
    %198 = vector.load %arg7[%c16_73, %c24_74] : memref<32x32xf32, #tpu.memory_space<vmem>>, vector<8x8xf32>
    tpu.vector_store %arg7[%c16_73, %c24_74], %197 {strides = array<i32>} : memref<32x32xf32, #tpu.memory_space<vmem>>, vector<8x8xf32>,
    %199 = vector.extract_strided_slice %6 {offsets = [24, 0], sizes = [8, 8], strides = [1, 1]} : vector<32x96xf32> to vector<8x8xf32>
    %200 = vector.extract_strided_slice %6 {offsets = [24, 32], sizes = [8, 8], strides = [1, 1]} : vector<32x96xf32> to vector<8x8xf32>
    %201 = vector.extract_strided_slice %6 {offsets = [24, 64], sizes = [8, 8], strides = [1, 1]} : vector<32x96xf32> to vector<8x8xf32>
    %cst_75 = arith.constant dense<0.000000e+00> : vector<8x8xf32>
    %202 = tpu.matmul %199, %200, %cst_75 {dimension_numbers = #tpu.dot_dimension_numbers<[1], [1], [0], [0], [0, 0, 1, 0], [], []>} : vector<8x8xf32>, vector<8x8xf32>, vector<8x8xf32> -> vector<8x8xf32>
    %cst_76 = arith.constant dense<0xFF800000> : vector<8xf32>
    %203 = vector.multi_reduction <maximumf>, %202, %cst_76 [1] : vector<8x8xf32> to vector<8xf32>
    %204 = vector.shape_cast %203 : vector<8xf32> to vector<8x1xf32>
    %205 = vector.broadcast %204 : vector<8x1xf32> to vector<8x8xf32>
    %206 = arith.subf %202, %205 : vector<8x8xf32>
    %207 = math.exp %206 : vector<8x8xf32>
    %cst_77 = arith.constant dense<0.000000e+00> : vector<8xf32>
    %208 = vector.multi_reduction <add>, %207, %cst_77 [1] : vector<8x8xf32> to vector<8xf32>
    %209 = vector.shape_cast %208 : vector<8xf32> to vector<8x1xf32>
    %210 = tpu.reciprocal %209 : vector<8x1xf32> -> vector<8x1xf32>
    %211 = vector.broadcast %210 : vector<8x1xf32> to vector<8x8xf32>
    %212 = arith.mulf %207, %211 : vector<8x8xf32>
    %cst_78 = arith.constant dense<0.000000e+00> : vector<8x8xf32>
    %213 = tpu.matmul %212, %201, %cst_78 {dimension_numbers = #tpu.dot_dimension_numbers<[1], [0], [0], [1], [0, 0, 1, 1], [], []>} : vector<8x8xf32>, vector<8x8xf32>, vector<8x8xf32> -> vector<8x8xf32>
    %c24_79 = arith.constant 24 : index
    %c0_80 = arith.constant 0 : index
    %214 = vector.load %arg7[%c24_79, %c0_80] : memref<32x32xf32, #tpu.memory_space<vmem>>, vector<8x8xf32>
    tpu.vector_store %arg7[%c24_79, %c0_80], %213 {strides = array<i32>} : memref<32x32xf32, #tpu.memory_space<vmem>>, vector<8x8xf32>,
    %215 = vector.extract_strided_slice %6 {offsets = [24, 8], sizes = [8, 8], strides = [1, 1]} : vector<32x96xf32> to vector<8x8xf32>
    %216 = vector.extract_strided_slice %6 {offsets = [24, 40], sizes = [8, 8], strides = [1, 1]} : vector<32x96xf32> to vector<8x8xf32>
    %217 = vector.extract_strided_slice %6 {offsets = [24, 72], sizes = [8, 8], strides = [1, 1]} : vector<32x96xf32> to vector<8x8xf32>
    %cst_81 = arith.constant dense<0.000000e+00> : vector<8x8xf32>
    %218 = tpu.matmul %215, %216, %cst_81 {dimension_numbers = #tpu.dot_dimension_numbers<[1], [1], [0], [0], [0, 0, 1, 0], [], []>} : vector<8x8xf32>, vector<8x8xf32>, vector<8x8xf32> -> vector<8x8xf32>
    %cst_82 = arith.constant dense<0xFF800000> : vector<8xf32>
    %219 = vector.multi_reduction <maximumf>, %218, %cst_82 [1] : vector<8x8xf32> to vector<8xf32>
    %220 = vector.shape_cast %219 : vector<8xf32> to vector<8x1xf32>
    %221 = vector.broadcast %220 : vector<8x1xf32> to vector<8x8xf32>
    %222 = arith.subf %218, %221 : vector<8x8xf32>
    %223 = math.exp %222 : vector<8x8xf32>
    %cst_83 = arith.constant dense<0.000000e+00> : vector<8xf32>
    %224 = vector.multi_reduction <add>, %223, %cst_83 [1] : vector<8x8xf32> to vector<8xf32>
    %225 = vector.shape_cast %224 : vector<8xf32> to vector<8x1xf32>
    %226 = tpu.reciprocal %225 : vector<8x1xf32> -> vector<8x1xf32>
    %227 = vector.broadcast %226 : vector<8x1xf32> to vector<8x8xf32>
    %228 = arith.mulf %223, %227 : vector<8x8xf32>
    %cst_84 = arith.constant dense<0.000000e+00> : vector<8x8xf32>
    %229 = tpu.matmul %228, %217, %cst_84 {dimension_numbers = #tpu.dot_dimension_numbers<[1], [0], [0], [1], [0, 0, 1, 1], [], []>} : vector<8x8xf32>, vector<8x8xf32>, vector<8x8xf32> -> vector<8x8xf32>
    %c24_85 = arith.constant 24 : index
    %c8_86 = arith.constant 8 : index
    %230 = vector.load %arg7[%c24_85, %c8_86] : memref<32x32xf32, #tpu.memory_space<vmem>>, vector<8x8xf32>
    tpu.vector_store %arg7[%c24_85, %c8_86], %229 {strides = array<i32>} : memref<32x32xf32, #tpu.memory_space<vmem>>, vector<8x8xf32>,
    %231 = vector.extract_strided_slice %6 {offsets = [24, 16], sizes = [8, 8], strides = [1, 1]} : vector<32x96xf32> to vector<8x8xf32>
    %232 = vector.extract_strided_slice %6 {offsets = [24, 48], sizes = [8, 8], strides = [1, 1]} : vector<32x96xf32> to vector<8x8xf32>
    %233 = vector.extract_strided_slice %6 {offsets = [24, 80], sizes = [8, 8], strides = [1, 1]} : vector<32x96xf32> to vector<8x8xf32>
    %cst_87 = arith.constant dense<0.000000e+00> : vector<8x8xf32>
    %234 = tpu.matmul %231, %232, %cst_87 {dimension_numbers = #tpu.dot_dimension_numbers<[1], [1], [0], [0], [0, 0, 1, 0], [], []>} : vector<8x8xf32>, vector<8x8xf32>, vector<8x8xf32> -> vector<8x8xf32>
    %cst_88 = arith.constant dense<0xFF800000> : vector<8xf32>
    %235 = vector.multi_reduction <maximumf>, %234, %cst_88 [1] : vector<8x8xf32> to vector<8xf32>
    %236 = vector.shape_cast %235 : vector<8xf32> to vector<8x1xf32>
    %237 = vector.broadcast %236 : vector<8x1xf32> to vector<8x8xf32>
    %238 = arith.subf %234, %237 : vector<8x8xf32>
    %239 = math.exp %238 : vector<8x8xf32>
    %cst_89 = arith.constant dense<0.000000e+00> : vector<8xf32>
    %240 = vector.multi_reduction <add>, %239, %cst_89 [1] : vector<8x8xf32> to vector<8xf32>
    %241 = vector.shape_cast %240 : vector<8xf32> to vector<8x1xf32>
    %242 = tpu.reciprocal %241 : vector<8x1xf32> -> vector<8x1xf32>
    %243 = vector.broadcast %242 : vector<8x1xf32> to vector<8x8xf32>
    %244 = arith.mulf %239, %243 : vector<8x8xf32>
    %cst_90 = arith.constant dense<0.000000e+00> : vector<8x8xf32>
    %245 = tpu.matmul %244, %233, %cst_90 {dimension_numbers = #tpu.dot_dimension_numbers<[1], [0], [0], [1], [0, 0, 1, 1], [], []>} : vector<8x8xf32>, vector<8x8xf32>, vector<8x8xf32> -> vector<8x8xf32>
    %c24_91 = arith.constant 24 : index
    %c16_92 = arith.constant 16 : index
    %246 = vector.load %arg7[%c24_91, %c16_92] : memref<32x32xf32, #tpu.memory_space<vmem>>, vector<8x8xf32>
    tpu.vector_store %arg7[%c24_91, %c16_92], %245 {strides = array<i32>} : memref<32x32xf32, #tpu.memory_space<vmem>>, vector<8x8xf32>,
    %247 = vector.extract_strided_slice %6 {offsets = [24, 24], sizes = [8, 8], strides = [1, 1]} : vector<32x96xf32> to vector<8x8xf32>
    %248 = vector.extract_strided_slice %6 {offsets = [24, 56], sizes = [8, 8], strides = [1, 1]} : vector<32x96xf32> to vector<8x8xf32>
    %249 = vector.extract_strided_slice %6 {offsets = [24, 88], sizes = [8, 8], strides = [1, 1]} : vector<32x96xf32> to vector<8x8xf32>
    %cst_93 = arith.constant dense<0.000000e+00> : vector<8x8xf32>
    %250 = tpu.matmul %247, %248, %cst_93 {dimension_numbers = #tpu.dot_dimension_numbers<[1], [1], [0], [0], [0, 0, 1, 0], [], []>} : vector<8x8xf32>, vector<8x8xf32>, vector<8x8xf32> -> vector<8x8xf32>
    %cst_94 = arith.constant dense<0xFF800000> : vector<8xf32>
    %251 = vector.multi_reduction <maximumf>, %250, %cst_94 [1] : vector<8x8xf32> to vector<8xf32>
    %252 = vector.shape_cast %251 : vector<8xf32> to vector<8x1xf32>
    %253 = vector.broadcast %252 : vector<8x1xf32> to vector<8x8xf32>
    %254 = arith.subf %250, %253 : vector<8x8xf32>
    %255 = math.exp %254 : vector<8x8xf32>
    %cst_95 = arith.constant dense<0.000000e+00> : vector<8xf32>
    %256 = vector.multi_reduction <add>, %255, %cst_95 [1] : vector<8x8xf32> to vector<8xf32>
    %257 = vector.shape_cast %256 : vector<8xf32> to vector<8x1xf32>
    %258 = tpu.reciprocal %257 : vector<8x1xf32> -> vector<8x1xf32>
    %259 = vector.broadcast %258 : vector<8x1xf32> to vector<8x8xf32>
    %260 = arith.mulf %255, %259 : vector<8x8xf32>
    %cst_96 = arith.constant dense<0.000000e+00> : vector<8x8xf32>
    %261 = tpu.matmul %260, %249, %cst_96 {dimension_numbers = #tpu.dot_dimension_numbers<[1], [0], [0], [1], [0, 0, 1, 1], [], []>} : vector<8x8xf32>, vector<8x8xf32>, vector<8x8xf32> -> vector<8x8xf32>
    %c24_97 = arith.constant 24 : index
    %c24_98 = arith.constant 24 : index
    %262 = vector.load %arg7[%c24_97, %c24_98] : memref<32x32xf32, #tpu.memory_space<vmem>>, vector<8x8xf32>
    tpu.vector_store %arg7[%c24_97, %c24_98], %261 {strides = array<i32>} : memref<32x32xf32, #tpu.memory_space<vmem>>, vector<8x8xf32>,
    %c0_99 = arith.constant 0 : index
    %c0_100 = arith.constant 0 : index
    %263 = vector.load %arg7[%c0_99, %c0_100] : memref<32x32xf32, #tpu.memory_space<vmem>>, vector<32x32xf32>
    %c0_101 = arith.constant 0 : index
    %c0_102 = arith.constant 0 : index
    %264 = vector.load %arg4[%c0_101, %c0_102] : memref<32x32xf32, #tpu.memory_space<vmem>>, vector<32x32xf32>
    %cst_103 = arith.constant dense<0.000000e+00> : vector<32x32xf32>
    %265 = tpu.matmul %263, %264, %cst_103 {dimension_numbers = #tpu.dot_dimension_numbers<[1], [0], [0], [1], [0, 0, 1, 1], [], []>} : vector<32x32xf32>, vector<32x32xf32>, vector<32x32xf32> -> vector<32x32xf32>
    %c0_104 = arith.constant 0 : index
    %c0_105 = arith.constant 0 : index
    %266 = vector.load %arg5[%c0_104, %c0_105] : memref<1x32xf32, #tpu.memory_space<vmem>>, vector<1x32xf32>
    %267 = vector.broadcast %266 : vector<1x32xf32> to vector<32x32xf32>
    %268 = arith.addf %265, %267 : vector<32x32xf32>
    %269 = vector.shape_cast %268 : vector<32x32xf32> to vector<4x8x32xf32>
    %c0_106 = arith.constant 0 : index
    %c0_107 = arith.constant 0 : index
    %c0_108 = arith.constant 0 : index
    %270 = vector.load %arg6[%c0_106, %c0_107, %c0_108] : memref<4x8x32xf32, #tpu.memory_space<vmem>>, vector<4x8x32xf32>
    tpu.vector_store %arg6[%c0_106, %c0_107, %c0_108], %269 {strides = array<i32>} : memref<4x8x32xf32, #tpu.memory_space<vmem>>, vector<4x8x32xf32>,
    return
  }
  func.func @transform_0(%arg0: i32) -> (i32, i32, i32) {
    %c0_i32 = arith.constant 0 : i32
    %c0_i32_0 = arith.constant 0 : i32
    %c0_i32_1 = arith.constant 0 : i32
    return %arg0, %c0_i32, %c0_i32_0 : i32, i32, i32
  }
  func.func @transform_1(%arg0: i32) -> (i32, i32) {
    %c0_i32 = arith.constant 0 : i32
    %c0_i32_0 = arith.constant 0 : i32
    %c0_i32_1 = arith.constant 0 : i32
    return %c0_i32, %c0_i32_0 : i32, i32
  }
  func.func @transform_2(%arg0: i32) -> (i32, i32) {
    %c0_i32 = arith.constant 0 : i32
    %c0_i32_0 = arith.constant 0 : i32
    %c0_i32_1 = arith.constant 0 : i32
    return %c0_i32, %c0_i32_0 : i32, i32
  }
  func.func @transform_3(%arg0: i32) -> (i32, i32) {
    %c0_i32 = arith.constant 0 : i32
    %c0_i32_0 = arith.constant 0 : i32
    %c0_i32_1 = arith.constant 0 : i32
    return %c0_i32, %c0_i32_0 : i32, i32
  }
  func.func @transform_4(%arg0: i32) -> (i32, i32) {
    %c0_i32 = arith.constant 0 : i32
    %c0_i32_0 = arith.constant 0 : i32
    %c0_i32_1 = arith.constant 0 : i32
    return %c0_i32, %c0_i32_0 : i32, i32
  }
  func.func @transform_5(%arg0: i32) -> (i32, i32, i32) {
    %c0_i32 = arith.constant 0 : i32
    %c0_i32_0 = arith.constant 0 : i32
    %c0_i32_1 = arith.constant 0 : i32
    return %arg0, %c0_i32, %c0_i32_0 : i32, i32, i32
  }
}

</mosaic_0001>

<llo_original>
// kernel: tpu_custom_call.1
$region0: #{tpu_custom_call.1}
  #allocation0 [shape = 'u32[]', space=smem, size = 0x4, offset = 0x4, fixed_abs, tag = 'smem constant byte address 0x4 - core index']
  #allocation1 [shape = 'u32[72,128]{1,0:T(1,128)}', space=vmem, size = 0x9000, scoped, tag = 'internal scratch']
  #allocation2 [shape = 'f32[32,32]{1,0:T(8,128)}', space=vmem, size = 0x4000, scoped, tag = 'scratch operand']
  %s0 = inlined_call_operand.hbm [shape: f32[8,8,32], index: 0, kind: input, shape index: {}]
  %s1 = inlined_call_operand.hbm [shape: f32[32,96], index: 1, kind: input, shape index: {}]
  %s2 = inlined_call_operand.vmem [shape: f32[1,96], index: 2, kind: input, shape index: {}]
  %s3 = inlined_call_operand.hbm [shape: f32[32,32], index: 3, kind: input, shape index: {}]
  %s4 = inlined_call_operand.vmem [shape: f32[1,32], index: 4, kind: input, shape index: {}]
  %s5 = inlined_call_operand.hbm [shape: f32[8,8,32], index: 5, kind: output, shape index: {}]
  %s6 = sld [smem:[#allocation0]]
  $region65: #{tpu_custom_call.1} parent=0
    _
  %s8 = ssub.s32 1, %s6
  %s9 = scalar_select 0, %s8, %s6
  $region1: #{tpu_custom_call.1} parent=0
    #allocation3 [shape = 'u8[32768]{0}', space=vmem, size = 0x8000, scoped, tag = 'input window, operand 0']
    #allocation4 [shape = 's32[2]{0}', space=sflag, size = 0x8, scoped, tag = 'scoped memory for tpu_custom_call.1']
    #allocation5 [shape = 's32[2]{0}', space=sflag, size = 0x8, scoped, tag = 'scoped memory for tpu_custom_call.1']
    #allocation6 [shape = 'u8[16384]{0}', space=vmem, size = 0x4000, scoped, tag = 'input window, operand 1, single buffered']
    #allocation7 [shape = 's32[1]{0}', space=sflag, size = 0x4, scoped, tag = 'scoped memory for tpu_custom_call.1']
    #allocation8 [shape = 'u8[16384]{0}', space=vmem, size = 0x4000, scoped, tag = 'input window, operand 3, single buffered']
    #allocation9 [shape = 'u8[32768]{0}', space=vmem, size = 0x8000, scoped, tag = 'output window, operand 0']
    %10 = vsyncpa [#allocation4], 0
    %s11 = scalar_lea.sflag [#allocation4], 1
    %12 = vsyncpa %s11, 0
    %13 = vsyncpa [#allocation7], 0
    %14 = vsyncpa [#allocation5], 0
    %s15 = scalar_lea.sflag [#allocation5], 1
    %16 = vsyncpa %s15, 0
    loop: start=0, step=1, limit=4
    $region2: #{tpu_custom_call.1} parent=1 // loop_pre_header
      _
    $region3: #{tpu_custom_call.1} parent=1 // loop_header
      %s18 = sphi 0, %s22
      %p19 = scmp.ge.s32.totalorder %s18, 4
      %s28 = sphi 0, %s30
      %s31 = sphi 0, %s28
      %s32 = sphi 0, %s31
      %s48 = sphi 0, %s32
      %s52 = sphi 0, %s52
      %s54 = sphi 0, %s52
      %s55 = sphi 0, %s54
      %s69 = sphi 0, %s55
      %s73 = sphi 0, %s73
      %s75 = sphi 0, %s73
      %s76 = sphi 0, %s75
      %s90 = sphi 0, %s76
      %s94 = sphi 0, %s94
      %s96 = sphi 0, %s94
      %s97 = sphi 0, %s96
      %s111 = sphi 0, %s97
      %s115 = sphi 0, %s115
      %s117 = sphi 0, %s115
      %s118 = sphi 0, %s117
      %s132 = sphi 0, %s118
      %s138 = sphi 0, %s140
      %s141 = sphi 0, %s138
      %s142 = sphi 0, %s141
      %s158 = sphi 0, %s142
    $region4: #{tpu_custom_call.1} parent=1 // loop_header_branch
      %21 = sbr.rel (%p19) target = $region8
    $region5: #{tpu_custom_call.1} parent=1 // loop_body
      %s23 = ssub.s32 %s18, 1
      %s24 = ssub.s32 %s18, 2
      %s25 = sadd.s32 %s18, 1
      %s26 = ssub.s32 %s18, %s25
      %p27 = scmp.eq.s32.totalorder %s26, 0
      %s29 = sadd.s32 %s28, 1
      %s30 = scalar_select %p27, %s28, %s29
      %p33 = pneg %p27
      %p34 = scmp.eq.s32.totalorder %s18, 1
      %p35 = por %p33, %p34
      %p36 = scmp.ne.s32.totalorder %s28, %s31
      %p37 = scmp.eq.s32.totalorder %s18, 0
      %p38 = por %p36, %p37
      %p39 = scmp.ne.s32.totalorder %s28, %s31
      %p40 = scmp.eq.s32.totalorder %s23, 1
      %p41 = por %p39, %p40
      %p42 = scmp.ne.s32.totalorder %s31, %s32
      %p43 = scmp.eq.s32.totalorder %s23, 0
      %p44 = por %p42, %p43
      %p45 = scmp.ne.s32.totalorder %s31, %s32
      %p46 = scmp.eq.s32.totalorder %s24, 1
      %p47 = por %p45, %p46
      %p49 = scmp.ne.s32.totalorder %s32, %s48
      %p50 = scmp.eq.s32.totalorder %s24, 0
      %p51 = por %p49, %p50
      %s53 = sadd.s32 %s52, 1
      %p56 = scmp.eq.s32.totalorder %s18, 1
      %p57 = scmp.ne.s32.totalorder %s52, %s54
      %p58 = scmp.eq.s32.totalorder %s18, 0
      %p59 = por %p57, %p58
      %p60 = scmp.ne.s32.totalorder %s52, %s54
      %p61 = scmp.eq.s32.totalorder %s23, 1
      %p62 = por %p60, %p61
      %p63 = scmp.ne.s32.totalorder %s54, %s55
      %p64 = scmp.eq.s32.totalorder %s23, 0
      %p65 = por %p63, %p64
      %p66 = scmp.ne.s32.totalorder %s54, %s55
      %p67 = scmp.eq.s32.totalorder %s24, 1
      %p68 = por %p66, %p67
      %p70 = scmp.ne.s32.totalorder %s55, %s69
      %p71 = scmp.eq.s32.totalorder %s24, 0
      %p72 = por %p70, %p71
      %s74 = sadd.s32 %s73, 1
      %p77 = scmp.eq.s32.totalorder %s18, 1
      %p78 = scmp.ne.s32.totalorder %s73, %s75
      %p79 = scmp.eq.s32.totalorder %s18, 0
      %p80 = por %p78, %p79
      %p81 = scmp.ne.s32.totalorder %s73, %s75
      %p82 = scmp.eq.s32.totalorder %s23, 1
      %p83 = por %p81, %p82
      %p84 = scmp.ne.s32.totalorder %s75, %s76
      %p85 = scmp.eq.s32.totalorder %s23, 0
      %p86 = por %p84, %p85
      %p87 = scmp.ne.s32.totalorder %s75, %s76
      %p88 = scmp.eq.s32.totalorder %s24, 1
      %p89 = por %p87, %p88
      %p91 = scmp.ne.s32.totalorder %s76, %s90
      %p92 = scmp.eq.s32.totalorder %s24, 0
      %p93 = por %p91, %p92
      %s95 = sadd.s32 %s94, 1
      %p98 = scmp.eq.s32.totalorder %s18, 1
      %p99 = scmp.ne.s32.totalorder %s94, %s96
      %p100 = scmp.eq.s32.totalorder %s18, 0
      %p101 = por %p99, %p100
      %p102 = scmp.ne.s32.totalorder %s94, %s96
      %p103 = scmp.eq.s32.totalorder %s23, 1
      %p104 = por %p102, %p103
      %p105 = scmp.ne.s32.totalorder %s96, %s97
      %p106 = scmp.eq.s32.totalorder %s23, 0
      %p107 = por %p105, %p106
      %p108 = scmp.ne.s32.totalorder %s96, %s97
      %p109 = scmp.eq.s32.totalorder %s24, 1
      %p110 = por %p108, %p109
      %p112 = scmp.ne.s32.totalorder %s97, %s111
      %p113 = scmp.eq.s32.totalorder %s24, 0
      %p114 = por %p112, %p113
      %s116 = sadd.s32 %s115, 1
      %p119 = scmp.eq.s32.totalorder %s18, 1
      %p120 = scmp.ne.s32.totalorder %s115, %s117
      %p121 = scmp.eq.s32.totalorder %s18, 0
      %p122 = por %p120, %p121
      %p123 = scmp.ne.s32.totalorder %s115, %s117
      %p124 = scmp.eq.s32.totalorder %s23, 1
      %p125 = por %p123, %p124
      %p126 = scmp.ne.s32.totalorder %s117, %s118
      %p127 = scmp.eq.s32.totalorder %s23, 0
      %p128 = por %p126, %p127
      %p129 = scmp.ne.s32.totalorder %s117, %s118
      %p130 = scmp.eq.s32.totalorder %s24, 1
      %p131 = por %p129, %p130
      %p133 = scmp.ne.s32.totalorder %s118, %s132
      %p134 = scmp.eq.s32.totalorder %s24, 0
      %p135 = por %p133, %p134
      %s136 = ssub.s32 %s18, %s25
      %p137 = scmp.eq.s32.totalorder %s136, 0
      %s139 = sadd.s32 %s138, 1
      %s140 = scalar_select %p137, %s138, %s139
      %p143 = pneg %p137
      %p144 = scmp.eq.s32.totalorder %s18, 1
      %p145 = por %p143, %p144
      %p146 = scmp.ne.s32.totalorder %s138, %s141
      %p147 = scmp.eq.s32.totalorder %s18, 0
      %p148 = por %p146, %p147
      %p149 = scmp.ne.s32.totalorder %s138, %s141
      %p150 = scmp.eq.s32.totalorder %s23, 1
      %p151 = por %p149, %p150
      %p152 = scmp.ne.s32.totalorder %s141, %s142
      %p153 = scmp.eq.s32.totalorder %s23, 0
      %p154 = por %p152, %p153
      %p155 = scmp.ne.s32.totalorder %s141, %s142
      %p156 = scmp.eq.s32.totalorder %s24, 1
      %p157 = por %p155, %p156
      %p159 = scmp.ne.s32.totalorder %s142, %s158
      %p160 = scmp.eq.s32.totalorder %s24, 0
      %p161 = por %p159, %p160
      %p162 = scmp.le.s32.totalorder 1, %s18
      %p163 = scmp.lt.s32.totalorder %s18, 3
      %p164 = pnand %p162, %p163
      %p165 = pneg %p164
      // Predicated region
      $region9: #{tpu_custom_call.1} parent=5 // pred_check
        _
      $region10: #{tpu_custom_call.1} parent=5 // pred_check_branch
        %167 = sbr.rel (%p164) target = $region12
      $region11: #{tpu_custom_call.1} parent=5 // pred_region
        %s168 = ssub.s32 %s18, 1
        // Predicated region
        $region13: #{tpu_custom_call.1} parent=11 // pred_check
          %p169 = pneg %p65
        $region14: #{tpu_custom_call.1} parent=11 // pred_check_branch
          %171 = sbr.rel (%p169) target = $region16
        $region15: #{tpu_custom_call.1} parent=11 // pred_region
          %173 = vsyncadd [#allocation7], 0
          %s174 = sshll.u32 %s1, 4
          %s175 = int_to_ptr.hbm [resolvable:$true] %s174
          %s176 = sshll.u32 [#allocation6], 4
          %s177 = int_to_ptr.vmem [resolvable:$true] %s176
          %182 = dma.hbm_to_vmem [thread:$0]  %s175, 512, %s177, [#allocation7], 128, 128, 8
        $region16: #{tpu_custom_call.1} parent=11 // pred_fallthru
          _
        // Predicated region
        $region17: #{tpu_custom_call.1} parent=11 // pred_check
          %p183 = pneg %p86
        $region18: #{tpu_custom_call.1} parent=11 // pred_check_branch
          %185 = sbr.rel (%p183) target = $region20
        $region19: #{tpu_custom_call.1} parent=11 // pred_region
          _
        $region20: #{tpu_custom_call.1} parent=11 // pred_fallthru
          _
        // Predicated region
        $region21: #{tpu_custom_call.1} parent=11 // pred_check
          %p186 = pneg %p107
        $region22: #{tpu_custom_call.1} parent=11 // pred_check_branch
          %188 = sbr.rel (%p186) target = $region24
        $region23: #{tpu_custom_call.1} parent=11 // pred_region
          %190 = vsyncadd [#allocation7], 0
          %s191 = sshll.u32 %s3, 4
          %s192 = int_to_ptr.hbm [resolvable:$true] %s191
          %s193 = sshll.u32 [#allocation8], 4
          %s194 = int_to_ptr.vmem [resolvable:$true] %s193
          %199 = dma.hbm_to_vmem [thread:$0]  %s192, 512, %s194, [#allocation7], 128, 128, 8
        $region24: #{tpu_custom_call.1} parent=11 // pred_fallthru
          _
        // Predicated region
        $region25: #{tpu_custom_call.1} parent=11 // pred_check
          %p200 = pneg %p128
        $region26: #{tpu_custom_call.1} parent=11 // pred_check_branch
          %202 = sbr.rel (%p200) target = $region28
        $region27: #{tpu_custom_call.1} parent=11 // pred_region
          _
        $region28: #{tpu_custom_call.1} parent=11 // pred_fallthru
          _
      $region12: #{tpu_custom_call.1} parent=5 // pred_fallthru
        _
      %p203 = scmp.lt.s32.totalorder %s18, 2
      // Predicated region
      $region29: #{tpu_custom_call.1} parent=5 // pred_check
        %p204 = pneg %p203
      $region30: #{tpu_custom_call.1} parent=5 // pred_check_branch
        %206 = sbr.rel (%p204) target = $region32
      $region31: #{tpu_custom_call.1} parent=5 // pred_region
        // Predicated region
        $region33: #{tpu_custom_call.1} parent=31 // pred_check
          %p207 = pneg %p38
        $region34: #{tpu_custom_call.1} parent=31 // pred_check_branch
          %209 = sbr.rel (%p207) target = $region36
        $region35: #{tpu_custom_call.1} parent=31 // pred_region
          %s210 = sand.u32 %s28, 1
          %s211 = scalar_lea.sflag [#allocation4], %s210
          %s212 = sand.u32 %s28, 1
          %s213 = smul.addr %s212, 32
          %s214 = scalar_lea.vmem [#allocation3], %s213
          %s215 = smul.u32 4, %s18
          %217 = vsyncadd %s211, 0
          %s218 = smul.addr %s215, 8
          %s219 = scalar_lea.hbm %s0, %s218
          %s220 = sshll.u32 %s219, 4
          %s221 = int_to_ptr.hbm [resolvable:$true] %s220
          %s222 = sshll.u32 %s214, 4
          %s223 = int_to_ptr.vmem [resolvable:$true] %s222
          %228 = dma.hbm_to_vmem [thread:$0]  %s221, 512, %s223, %s211, 128, 128, 8
        $region36: #{tpu_custom_call.1} parent=31 // pred_fallthru
          _
      $region32: #{tpu_custom_call.1} parent=5 // pred_fallthru
        _
      %p229 = scmp.le.s32.totalorder 1, %s18
      %p230 = scmp.lt.s32.totalorder %s18, 3
      %p231 = pnand %p229, %p230
      %p232 = pneg %p231
      // Predicated region
      $region37: #{tpu_custom_call.1} parent=5 // pred_check
        _
      $region38: #{tpu_custom_call.1} parent=5 // pred_check_branch
        %234 = sbr.rel (%p231) target = $region40
      $region39: #{tpu_custom_call.1} parent=5 // pred_region
        %s235 = ssub.s32 %s18, 1
        %s236 = sand.u32 %s31, 1
        %s237 = scalar_lea.sflag [#allocation4], %s236
        %s238 = sand.u32 %s31, 1
        %s239 = smul.addr %s238, 32
        %s240 = scalar_lea.vmem [#allocation3], %s239
        // Predicated region
        $region41: #{tpu_custom_call.1} parent=39 // pred_check
          %p241 = pneg %p44
        $region42: #{tpu_custom_call.1} parent=39 // pred_check_branch
          %243 = sbr.rel (%p241) target = $region44
        $region43: #{tpu_custom_call.1} parent=39 // pred_region
          %245 = dma.done %s237, 512
        $region44: #{tpu_custom_call.1} parent=39 // pred_fallthru
          _
        // Predicated region
        $region45: #{tpu_custom_call.1} parent=39 // pred_check
          %p246 = pneg %p65
        $region46: #{tpu_custom_call.1} parent=39 // pred_check_branch
          %248 = sbr.rel (%p246) target = $region48
        $region47: #{tpu_custom_call.1} parent=39 // pred_region
          %250 = dma.done [#allocation7], 512
        $region48: #{tpu_custom_call.1} parent=39 // pred_fallthru
          _
        // Predicated region
        $region49: #{tpu_custom_call.1} parent=39 // pred_check
          %p251 = pneg %p107
        $region50: #{tpu_custom_call.1} parent=39 // pred_check_branch
          %253 = sbr.rel (%p251) target = $region52
        $region51: #{tpu_custom_call.1} parent=39 // pred_region
          %255 = dma.done [#allocation7], 512
        $region52: #{tpu_custom_call.1} parent=39 // pred_fallthru
          _
        %s256 = sand.u32 %s31, 1
        %s257 = scalar_lea.sflag [#allocation4], %s256
        %s258 = sand.u32 %s31, 1
        %s259 = smul.addr %s258, 32
        %s260 = scalar_lea.vmem [#allocation3], %s259
        %p261 = pneg %p44
        %p262 = pneg %p41
        %p263 = pneg %p65
        %p264 = pneg %p62
        %p265 = pneg %p86
        %p266 = pneg %p83
        %p267 = pneg %p107
        %p268 = pneg %p104
        %p269 = pneg %p128
        %p270 = pneg %p125
        %p271 = pneg %p154
        %p272 = pneg %p151
        %s273 = sand.u32 %s141, 1
        %s274 = scalar_lea.sflag [#allocation5], %s273
        %s275 = sand.u32 %s141, 1
        %s276 = smul.addr %s275, 32
        %s277 = scalar_lea.vmem [#allocation9], %s276
        %s278 = smul.u32 4, %s23
        %s279 = smul.u32 4, %s23
        %v280 = vld [vmem:[%s240] sm:$0xff]
        %v281 = vld [vmem:[%s240 + $0x8] sm:$0xff]
        %v282 = vld [vmem:[%s240 + $0x10] sm:$0xff]
        %v283 = vld [vmem:[%s240 + $0x18] sm:$0xff]
        %v284 = vld [vmem:[#allocation6] sm:$0xff]
        %v285 = vld [vmem:[#allocation6 + $0x8] sm:$0xff]
        %v286 = vld [vmem:[#allocation6 + $0x10] sm:$0xff]
        %v287 = vld [vmem:[#allocation6 + $0x18] sm:$0xff]
        %v288 = vld [vmem:[%s2] sm:$0x1]
        %v290 = vperm.slane %v288, 0
        %vm292 = vcmask 261120
        %v294 = vsel %vm292, %v280, 0
        %v297 = vsel %vm292, %v281, 0
        %v300 = vsel %vm292, %v282, 0
        %v303 = vsel %vm292, %v283, 0
        %305 = vmatpush.msra.mxu0 0.0
        %306 = vmatpush.msra.mxu0 0.0
        %307 = vmatpush.msra.mxu0 0.0
        %308 = vmatpush.msra.mxu0 0.0
        %309 = vmatpush.msra.mxu0 0.0
        %310 = vmatpush.msra.mxu0 0.0
        %311 = vmatpush.msra.mxu0 0.0
        %312 = vmatpush.msra.mxu0 0.0
        %313 = vmatpush.msra.mxu0 0.0
        %314 = vmatpush.msra.mxu0 0.0
        %315 = vmatpush.msra.mxu0 0.0
        %316 = vmatpush.msra.mxu0 0.0
        %317 = vmatpush.msra.mxu0 %v287
        %318 = vmatpush.msra.mxu0 %v286
        %319 = vmatpush.msra.mxu0 %v285
        %320 = vmatpush.msra.mxu0 %v284
        %321 = vmatmul.f32.gmra.mxu0 %v294
        %v322 = vpop.f32.mrf.mxu0
        %v323 = vadd.f32 %v290, %v322
        %324 = vmatmul.f32.gmra.mxu0 %v297
        %v325 = vpop.f32.mrf.mxu0
        %v326 = vadd.f32 %v290, %v325
        %327 = vmatmul.f32.gmra.mxu0 %v300
        %v328 = vpop.f32.mrf.mxu0
        %v329 = vadd.f32 %v290, %v328
        %330 = vmatmul.f32.gmra.mxu0 %v303
        %v331 = vpop.f32.mrf.mxu0
        %v332 = vadd.f32 %v290, %v331
        %333 = vdwg.mxu0
        %335 = vrot.lane.b32.xlu0 %v323, 96
        %v336 = vpop.permute.xlu0 %335
        %vm337 = vcmask 64512
        %v338 = vsel %vm337, %v323, 0
        %v340 = vsel %vm337, %v336, 0
        %342 = vmatpush.xpose.msra.mxu0 0.0
        %343 = vmatpush.xpose.msra.mxu0 0.0
        %344 = vmatpush.xpose.msra.mxu0 0.0
        %345 = vmatpush.xpose.msra.mxu0 0.0
        %346 = vmatpush.xpose.msra.mxu0 0.0
        %347 = vmatpush.xpose.msra.mxu0 0.0
        %348 = vmatpush.xpose.msra.mxu0 0.0
        %349 = vmatpush.xpose.msra.mxu0 0.0
        %350 = vmatpush.xpose.msra.mxu0 0.0
        %351 = vmatpush.xpose.msra.mxu0 0.0
        %352 = vmatpush.xpose.msra.mxu0 0.0
        %353 = vmatpush.xpose.msra.mxu0 0.0
        %354 = vmatpush.xpose.msra.mxu0 0.0
        %355 = vmatpush.xpose.msra.mxu0 0.0
        %356 = vmatpush.xpose.msra.mxu0 0.0
        %357 = vmatpush.xpose.msra.mxu0 %v340
        %358 = vmatmul.f32.gmra.mxu0 %v338
        %v359 = vpop.f32.mrf.mxu0
        %v360 = vadd.f32 0.0, %v359
        %361 = vdwg.mxu0
        %v362 = vsel %vm337, %v360, -inf
        %363 = vmax.xlane.f32.xlu0 %v362
        %v364 = vpop.xlane.xlu0 %363
        %v365 = vsub.f32 %v360, %v364
        %v366 = vmul.f32 %v365, 1.442695
        %v367 = vpow.pop %v366
        %v368 = vsel %vm337, %v367, 0.0
        %369 = vadd.xlane.f32.xlu0 %v368
        %v370 = vpop.xlane.xlu0 %369
        %v371 = vrcp.pop %v370
        %v372 = vmul.f32 %v370, %v371
        %v373 = vsub.f32 1.0, %v372
        %v374 = vmul.f32 %v371, %v373
        %v375 = vadd.f32 %v371, %v374
        %vm376 = vweird.f32 %v370
        %vm377 = vweird.f32 %v371
        %vm378 = vmor %vm376, %vm377
        %v379 = vsel %vm378, %v371, %v375
        %v380 = vand.u32 2147483647, %v370
        %vm381 = vcmp.eq.f32.partialorder %v380, 8.507059e+37
        %v382 = vand.u32 %v370, 2147483648
        %v383 = vor.u32 1.1754944e-38, %v382
        %v384 = vsel %vm381, %v383, %v379
        %v385 = vmul.f32 %v367, %v384
        %386 = vrot.lane.b32.xlu0 %v323, 64
        %v387 = vpop.permute.xlu0 %386
        %v390 = vsel %vm337, %v385, 0
        %392 = vmatpush.msra.mxu0 0.0
        %393 = vmatpush.msra.mxu0 0.0
        %394 = vmatpush.msra.mxu0 0.0
        %395 = vmatpush.msra.mxu0 0.0
        %396 = vmatpush.msra.mxu0 0.0
        %397 = vmatpush.msra.mxu0 0.0
        %398 = vmatpush.msra.mxu0 0.0
        %399 = vmatpush.msra.mxu0 0.0
        %400 = vmatpush.msra.mxu0 0.0
        %401 = vmatpush.msra.mxu0 0.0
        %402 = vmatpush.msra.mxu0 0.0
        %403 = vmatpush.msra.mxu0 0.0
        %404 = vmatpush.msra.mxu0 0.0
        %405 = vmatpush.msra.mxu0 0.0
        %406 = vmatpush.msra.mxu0 0.0
        %407 = vmatpush.msra.mxu0 %v387
        %408 = vmatmul.f32.gmra.mxu0 %v390
        %v409 = vpop.f32.mrf.mxu0
        %v410 = vadd.f32 0.0, %v409
        %411 = vdwg.mxu0
        %412 = vst.msk [vmem:[#allocation2] sm:$0xff] %vm337, %v410
        %413 = vrot.lane.b32.xlu0 %v323, 120
        %v414 = vpop.permute.xlu0 %413
        %415 = vrot.lane.b32.xlu0 %v323, 88
        %v416 = vpop.permute.xlu0 %415
        %v417 = vsel %vm337, %v414, 0
        %v419 = vsel %vm337, %v416, 0
        %421 = vmatpush.xpose.msra.mxu0 0.0
        %422 = vmatpush.xpose.msra.mxu0 0.0
        %423 = vmatpush.xpose.msra.mxu0 0.0
        %424 = vmatpush.xpose.msra.mxu0 0.0
        %425 = vmatpush.xpose.msra.mxu0 0.0
        %426 = vmatpush.xpose.msra.mxu0 0.0
        %427 = vmatpush.xpose.msra.mxu0 0.0
        %428 = vmatpush.xpose.msra.mxu0 0.0
        %429 = vmatpush.xpose.msra.mxu0 0.0
        %430 = vmatpush.xpose.msra.mxu0 0.0
        %431 = vmatpush.xpose.msra.mxu0 0.0
        %432 = vmatpush.xpose.msra.mxu0 0.0
        %433 = vmatpush.xpose.msra.mxu0 0.0
        %434 = vmatpush.xpose.msra.mxu0 0.0
        %435 = vmatpush.xpose.msra.mxu0 0.0
        %436 = vmatpush.xpose.msra.mxu0 %v419
        %437 = vmatmul.f32.gmra.mxu0 %v417
        %v438 = vpop.f32.mrf.mxu0
        %v439 = vadd.f32 0.0, %v438
        %440 = vdwg.mxu0
        %v441 = vsel %vm337, %v439, -inf
        %442 = vmax.xlane.f32.xlu0 %v441
        %v443 = vpop.xlane.xlu0 %442
        %v444 = vsub.f32 %v439, %v443
        %v445 = vmul.f32 %v444, 1.442695
        %v446 = vpow.pop %v445
        %v447 = vsel %vm337, %v446, 0.0
        %448 = vadd.xlane.f32.xlu0 %v447
        %v449 = vpop.xlane.xlu0 %448
        %v450 = vrcp.pop %v449
        %v451 = vmul.f32 %v449, %v450
        %v452 = vsub.f32 1.0, %v451
        %v453 = vmul.f32 %v450, %v452
        %v454 = vadd.f32 %v450, %v453
        %vm455 = vweird.f32 %v449
        %vm456 = vweird.f32 %v450
        %vm457 = vmor %vm455, %vm456
        %v458 = vsel %vm457, %v450, %v454
        %v459 = vand.u32 2147483647, %v449
        %vm460 = vcmp.eq.f32.partialorder %v459, 8.507059e+37
        %v461 = vand.u32 %v449, 2147483648
        %v462 = vor.u32 1.1754944e-38, %v461
        %v463 = vsel %vm460, %v462, %v458
        %v464 = vmul.f32 %v446, %v463
        %465 = vrot.lane.b32.xlu0 %v323, 56
        %v466 = vpop.permute.xlu0 %465
        %v469 = vsel %vm337, %v464, 0
        %471 = vmatpush.msra.mxu0 0.0
        %472 = vmatpush.msra.mxu0 0.0
        %473 = vmatpush.msra.mxu0 0.0
        %474 = vmatpush.msra.mxu0 0.0
        %475 = vmatpush.msra.mxu0 0.0
        %476 = vmatpush.msra.mxu0 0.0
        %477 = vmatpush.msra.mxu0 0.0
        %478 = vmatpush.msra.mxu0 0.0
        %479 = vmatpush.msra.mxu0 0.0
        %480 = vmatpush.msra.mxu0 0.0
        %481 = vmatpush.msra.mxu0 0.0
        %482 = vmatpush.msra.mxu0 0.0
        %483 = vmatpush.msra.mxu0 0.0
        %484 = vmatpush.msra.mxu0 0.0
        %485 = vmatpush.msra.mxu0 0.0
        %486 = vmatpush.msra.mxu0 %v466
        %487 = vmatmul.f32.gmra.mxu0 %v469
        %v488 = vpop.f32.mrf.mxu0
        %v489 = vadd.f32 0.0, %v488
        %490 = vdwg.mxu0
        %492 = vrot.lane.b32.xlu0 %v489, 8
        %v493 = vpop.permute.xlu0 %492
        %vm495 = vcmask 130112
        %496 = vst.msk [vmem:[#allocation2] sm:$0xff] %vm495, %v493
        %497 = vrot.lane.b32.xlu0 %v323, 112
        %v498 = vpop.permute.xlu0 %497
        %499 = vrot.lane.b32.xlu0 %v323, 80
        %v500 = vpop.permute.xlu0 %499
        %v501 = vsel %vm337, %v498, 0
        %v503 = vsel %vm337, %v500, 0
        %505 = vmatpush.xpose.msra.mxu0 0.0
        %506 = vmatpush.xpose.msra.mxu0 0.0
        %507 = vmatpush.xpose.msra.mxu0 0.0
        %508 = vmatpush.xpose.msra.mxu0 0.0
        %509 = vmatpush.xpose.msra.mxu0 0.0
        %510 = vmatpush.xpose.msra.mxu0 0.0
        %511 = vmatpush.xpose.msra.mxu0 0.0
        %512 = vmatpush.xpose.msra.mxu0 0.0
        %513 = vmatpush.xpose.msra.mxu0 0.0
        %514 = vmatpush.xpose.msra.mxu0 0.0
        %515 = vmatpush.xpose.msra.mxu0 0.0
        %516 = vmatpush.xpose.msra.mxu0 0.0
        %517 = vmatpush.xpose.msra.mxu0 0.0
        %518 = vmatpush.xpose.msra.mxu0 0.0
        %519 = vmatpush.xpose.msra.mxu0 0.0
        %520 = vmatpush.xpose.msra.mxu0 %v503
        %521 = vmatmul.f32.gmra.mxu0 %v501
        %v522 = vpop.f32.mrf.mxu0
        %v523 = vadd.f32 0.0, %v522
        %524 = vdwg.mxu0
        %v525 = vsel %vm337, %v523, -inf
        %526 = vmax.xlane.f32.xlu0 %v525
        %v527 = vpop.xlane.xlu0 %526
        %v528 = vsub.f32 %v523, %v527
        %v529 = vmul.f32 %v528, 1.442695
        %v530 = vpow.pop %v529
        %v531 = vsel %vm337, %v530, 0.0
        %532 = vadd.xlane.f32.xlu0 %v531
        %v533 = vpop.xlane.xlu0 %532
        %v534 = vrcp.pop %v533
        %v535 = vmul.f32 %v533, %v534
        %v536 = vsub.f32 1.0, %v535
        %v537 = vmul.f32 %v534, %v536
        %v538 = vadd.f32 %v534, %v537
        %vm539 = vweird.f32 %v533
        %vm540 = vweird.f32 %v534
        %vm541 = vmor %vm539, %vm540
        %v542 = vsel %vm541, %v534, %v538
        %v543 = vand.u32 2147483647, %v533
        %vm544 = vcmp.eq.f32.partialorder %v543, 8.507059e+37
        %v545 = vand.u32 %v533, 2147483648
        %v546 = vor.u32 1.1754944e-38, %v545
        %v547 = vsel %vm544, %v546, %v542
        %v548 = vmul.f32 %v530, %v547
        %549 = vrot.lane.b32.xlu0 %v323, 48
        %v550 = vpop.permute.xlu0 %549
        %v553 = vsel %vm337, %v548, 0
        %555 = vmatpush.msra.mxu0 0.0
        %556 = vmatpush.msra.mxu0 0.0
        %557 = vmatpush.msra.mxu0 0.0
        %558 = vmatpush.msra.mxu0 0.0
        %559 = vmatpush.msra.mxu0 0.0
        %560 = vmatpush.msra.mxu0 0.0
        %561 = vmatpush.msra.mxu0 0.0
        %562 = vmatpush.msra.mxu0 0.0
        %563 = vmatpush.msra.mxu0 0.0
        %564 = vmatpush.msra.mxu0 0.0
        %565 = vmatpush.msra.mxu0 0.0
        %566 = vmatpush.msra.mxu0 0.0
        %567 = vmatpush.msra.mxu0 0.0
        %568 = vmatpush.msra.mxu0 0.0
        %569 = vmatpush.msra.mxu0 0.0
        %570 = vmatpush.msra.mxu0 %v550
        %571 = vmatmul.f32.gmra.mxu0 %v553
        %v572 = vpop.f32.mrf.mxu0
        %v573 = vadd.f32 0.0, %v572
        %574 = vdwg.mxu0
        %576 = vrot.lane.b32.xlu0 %v573, 16
        %v577 = vpop.permute.xlu0 %576
        %vm579 = vcmask 195712
        %580 = vst.msk [vmem:[#allocation2] sm:$0xff] %vm579, %v577
        %581 = vrot.lane.b32.xlu0 %v323, 104
        %v582 = vpop.permute.xlu0 %581
        %583 = vrot.lane.b32.xlu0 %v323, 72
        %v584 = vpop.permute.xlu0 %583
        %v585 = vsel %vm337, %v582, 0
        %v587 = vsel %vm337, %v584, 0
        %589 = vmatpush.xpose.msra.mxu0 0.0
        %590 = vmatpush.xpose.msra.mxu0 0.0
        %591 = vmatpush.xpose.msra.mxu0 0.0
        %592 = vmatpush.xpose.msra.mxu0 0.0
        %593 = vmatpush.xpose.msra.mxu0 0.0
        %594 = vmatpush.xpose.msra.mxu0 0.0
        %595 = vmatpush.xpose.msra.mxu0 0.0
        %596 = vmatpush.xpose.msra.mxu0 0.0
        %597 = vmatpush.xpose.msra.mxu0 0.0
        %598 = vmatpush.xpose.msra.mxu0 0.0
        %599 = vmatpush.xpose.msra.mxu0 0.0
        %600 = vmatpush.xpose.msra.mxu0 0.0
        %601 = vmatpush.xpose.msra.mxu0 0.0
        %602 = vmatpush.xpose.msra.mxu0 0.0
        %603 = vmatpush.xpose.msra.mxu0 0.0
        %604 = vmatpush.xpose.msra.mxu0 %v587
        %605 = vmatmul.f32.gmra.mxu0 %v585
        %v606 = vpop.f32.mrf.mxu0
        %v607 = vadd.f32 0.0, %v606
        %608 = vdwg.mxu0
        %v609 = vsel %vm337, %v607, -inf
        %610 = vmax.xlane.f32.xlu0 %v609
        %v611 = vpop.xlane.xlu0 %610
        %v612 = vsub.f32 %v607, %v611
        %v613 = vmul.f32 %v612, 1.442695
        %v614 = vpow.pop %v613
        %v615 = vsel %vm337, %v614, 0.0
        %616 = vadd.xlane.f32.xlu0 %v615
        %v617 = vpop.xlane.xlu0 %616
        %v618 = vrcp.pop %v617
        %v619 = vmul.f32 %v617, %v618
        %v620 = vsub.f32 1.0, %v619
        %v621 = vmul.f32 %v618, %v620
        %v622 = vadd.f32 %v618, %v621
        %vm623 = vweird.f32 %v617
        %vm624 = vweird.f32 %v618
        %vm625 = vmor %vm623, %vm624
        %v626 = vsel %vm625, %v618, %v622
        %v627 = vand.u32 2147483647, %v617
        %vm628 = vcmp.eq.f32.partialorder %v627, 8.507059e+37
        %v629 = vand.u32 %v617, 2147483648
        %v630 = vor.u32 1.1754944e-38, %v629
        %v631 = vsel %vm628, %v630, %v626
        %v632 = vmul.f32 %v614, %v631
        %633 = vrot.lane.b32.xlu0 %v323, 40
        %v634 = vpop.permute.xlu0 %633
        %v637 = vsel %vm337, %v632, 0
        %639 = vmatpush.msra.mxu0 0.0
        %640 = vmatpush.msra.mxu0 0.0
        %641 = vmatpush.msra.mxu0 0.0
        %642 = vmatpush.msra.mxu0 0.0
        %643 = vmatpush.msra.mxu0 0.0
        %644 = vmatpush.msra.mxu0 0.0
        %645 = vmatpush.msra.mxu0 0.0
        %646 = vmatpush.msra.mxu0 0.0
        %647 = vmatpush.msra.mxu0 0.0
        %648 = vmatpush.msra.mxu0 0.0
        %649 = vmatpush.msra.mxu0 0.0
        %650 = vmatpush.msra.mxu0 0.0
        %651 = vmatpush.msra.mxu0 0.0
        %652 = vmatpush.msra.mxu0 0.0
        %653 = vmatpush.msra.mxu0 0.0
        %654 = vmatpush.msra.mxu0 %v634
        %655 = vmatmul.f32.gmra.mxu0 %v637
        %v656 = vpop.f32.mrf.mxu0
        %v657 = vadd.f32 0.0, %v656
        %658 = vdwg.mxu0
        %660 = vrot.lane.b32.xlu0 %v657, 24
        %v661 = vpop.permute.xlu0 %660
        %vm663 = vcmask 261312
        %664 = vst.msk [vmem:[#allocation2] sm:$0xff] %vm663, %v661
        %666 = vrot.lane.b32.xlu0 %v326, 96
        %v667 = vpop.permute.xlu0 %666
        %v668 = vsel %vm337, %v326, 0
        %v670 = vsel %vm337, %v667, 0
        %672 = vmatpush.xpose.msra.mxu0 0.0
        %673 = vmatpush.xpose.msra.mxu0 0.0
        %674 = vmatpush.xpose.msra.mxu0 0.0
        %675 = vmatpush.xpose.msra.mxu0 0.0
        %676 = vmatpush.xpose.msra.mxu0 0.0
        %677 = vmatpush.xpose.msra.mxu0 0.0
        %678 = vmatpush.xpose.msra.mxu0 0.0
        %679 = vmatpush.xpose.msra.mxu0 0.0
        %680 = vmatpush.xpose.msra.mxu0 0.0
        %681 = vmatpush.xpose.msra.mxu0 0.0
        %682 = vmatpush.xpose.msra.mxu0 0.0
        %683 = vmatpush.xpose.msra.mxu0 0.0
        %684 = vmatpush.xpose.msra.mxu0 0.0
        %685 = vmatpush.xpose.msra.mxu0 0.0
        %686 = vmatpush.xpose.msra.mxu0 0.0
        %687 = vmatpush.xpose.msra.mxu0 %v670
        %688 = vmatmul.f32.gmra.mxu0 %v668
        %v689 = vpop.f32.mrf.mxu0
        %v690 = vadd.f32 0.0, %v689
        %691 = vdwg.mxu0
        %v692 = vsel %vm337, %v690, -inf
        %693 = vmax.xlane.f32.xlu0 %v692
        %v694 = vpop.xlane.xlu0 %693
        %v695 = vsub.f32 %v690, %v694
        %v696 = vmul.f32 %v695, 1.442695
        %v697 = vpow.pop %v696
        %v698 = vsel %vm337, %v697, 0.0
        %699 = vadd.xlane.f32.xlu0 %v698
        %v700 = vpop.xlane.xlu0 %699
        %v701 = vrcp.pop %v700
        %v702 = vmul.f32 %v700, %v701
        %v703 = vsub.f32 1.0, %v702
        %v704 = vmul.f32 %v701, %v703
        %v705 = vadd.f32 %v701, %v704
        %vm706 = vweird.f32 %v700
        %vm707 = vweird.f32 %v701
        %vm708 = vmor %vm706, %vm707
        %v709 = vsel %vm708, %v701, %v705
        %v710 = vand.u32 2147483647, %v700
        %vm711 = vcmp.eq.f32.partialorder %v710, 8.507059e+37
        %v712 = vand.u32 %v700, 2147483648
        %v713 = vor.u32 1.1754944e-38, %v712
        %v714 = vsel %vm711, %v713, %v709
        %v715 = vmul.f32 %v697, %v714
        %716 = vrot.lane.b32.xlu0 %v326, 64
        %v717 = vpop.permute.xlu0 %716
        %v720 = vsel %vm337, %v715, 0
        %722 = vmatpush.msra.mxu0 0.0
        %723 = vmatpush.msra.mxu0 0.0
        %724 = vmatpush.msra.mxu0 0.0
        %725 = vmatpush.msra.mxu0 0.0
        %726 = vmatpush.msra.mxu0 0.0
        %727 = vmatpush.msra.mxu0 0.0
        %728 = vmatpush.msra.mxu0 0.0
        %729 = vmatpush.msra.mxu0 0.0
        %730 = vmatpush.msra.mxu0 0.0
        %731 = vmatpush.msra.mxu0 0.0
        %732 = vmatpush.msra.mxu0 0.0
        %733 = vmatpush.msra.mxu0 0.0
        %734 = vmatpush.msra.mxu0 0.0
        %735 = vmatpush.msra.mxu0 0.0
        %736 = vmatpush.msra.mxu0 0.0
        %737 = vmatpush.msra.mxu0 %v717
        %738 = vmatmul.f32.gmra.mxu0 %v720
        %v739 = vpop.f32.mrf.mxu0
        %v740 = vadd.f32 0.0, %v739
        %741 = vdwg.mxu0
        %742 = vst.msk [vmem:[#allocation2 + $0x8] sm:$0xff] %vm337, %v740
        %743 = vrot.lane.b32.xlu0 %v326, 120
        %v744 = vpop.permute.xlu0 %743
        %745 = vrot.lane.b32.xlu0 %v326, 88
        %v746 = vpop.permute.xlu0 %745
        %v747 = vsel %vm337, %v744, 0
        %v749 = vsel %vm337, %v746, 0
        %751 = vmatpush.xpose.msra.mxu0 0.0
        %752 = vmatpush.xpose.msra.mxu0 0.0
        %753 = vmatpush.xpose.msra.mxu0 0.0
        %754 = vmatpush.xpose.msra.mxu0 0.0
        %755 = vmatpush.xpose.msra.mxu0 0.0
        %756 = vmatpush.xpose.msra.mxu0 0.0
        %757 = vmatpush.xpose.msra.mxu0 0.0
        %758 = vmatpush.xpose.msra.mxu0 0.0
        %759 = vmatpush.xpose.msra.mxu0 0.0
        %760 = vmatpush.xpose.msra.mxu0 0.0
        %761 = vmatpush.xpose.msra.mxu0 0.0
        %762 = vmatpush.xpose.msra.mxu0 0.0
        %763 = vmatpush.xpose.msra.mxu0 0.0
        %764 = vmatpush.xpose.msra.mxu0 0.0
        %765 = vmatpush.xpose.msra.mxu0 0.0
        %766 = vmatpush.xpose.msra.mxu0 %v749
        %767 = vmatmul.f32.gmra.mxu0 %v747
        %v768 = vpop.f32.mrf.mxu0
        %v769 = vadd.f32 0.0, %v768
        %770 = vdwg.mxu0
        %v771 = vsel %vm337, %v769, -inf
        %772 = vmax.xlane.f32.xlu0 %v771
        %v773 = vpop.xlane.xlu0 %772
        %v774 = vsub.f32 %v769, %v773
        %v775 = vmul.f32 %v774, 1.442695
        %v776 = vpow.pop %v775
        %v777 = vsel %vm337, %v776, 0.0
        %778 = vadd.xlane.f32.xlu0 %v777
        %v779 = vpop.xlane.xlu0 %778
        %v780 = vrcp.pop %v779
        %v781 = vmul.f32 %v779, %v780
        %v782 = vsub.f32 1.0, %v781
        %v783 = vmul.f32 %v780, %v782
        %v784 = vadd.f32 %v780, %v783
        %vm785 = vweird.f32 %v779
        %vm786 = vweird.f32 %v780
        %vm787 = vmor %vm785, %vm786
        %v788 = vsel %vm787, %v780, %v784
        %v789 = vand.u32 2147483647, %v779
        %vm790 = vcmp.eq.f32.partialorder %v789, 8.507059e+37
        %v791 = vand.u32 %v779, 2147483648
        %v792 = vor.u32 1.1754944e-38, %v791
        %v793 = vsel %vm790, %v792, %v788
        %v794 = vmul.f32 %v776, %v793
        %795 = vrot.lane.b32.xlu0 %v326, 56
        %v796 = vpop.permute.xlu0 %795
        %v799 = vsel %vm337, %v794, 0
        %801 = vmatpush.msra.mxu0 0.0
        %802 = vmatpush.msra.mxu0 0.0
        %803 = vmatpush.msra.mxu0 0.0
        %804 = vmatpush.msra.mxu0 0.0
        %805 = vmatpush.msra.mxu0 0.0
        %806 = vmatpush.msra.mxu0 0.0
        %807 = vmatpush.msra.mxu0 0.0
        %808 = vmatpush.msra.mxu0 0.0
        %809 = vmatpush.msra.mxu0 0.0
        %810 = vmatpush.msra.mxu0 0.0
        %811 = vmatpush.msra.mxu0 0.0
        %812 = vmatpush.msra.mxu0 0.0
        %813 = vmatpush.msra.mxu0 0.0
        %814 = vmatpush.msra.mxu0 0.0
        %815 = vmatpush.msra.mxu0 0.0
        %816 = vmatpush.msra.mxu0 %v796
        %817 = vmatmul.f32.gmra.mxu0 %v799
        %v818 = vpop.f32.mrf.mxu0
        %v819 = vadd.f32 0.0, %v818
        %820 = vdwg.mxu0
        %822 = vrot.lane.b32.xlu0 %v819, 8
        %v823 = vpop.permute.xlu0 %822
        %825 = vst.msk [vmem:[#allocation2 + $0x8] sm:$0xff] %vm495, %v823
        %826 = vrot.lane.b32.xlu0 %v326, 112
        %v827 = vpop.permute.xlu0 %826
        %828 = vrot.lane.b32.xlu0 %v326, 80
        %v829 = vpop.permute.xlu0 %828
        %v830 = vsel %vm337, %v827, 0
        %v832 = vsel %vm337, %v829, 0
        %834 = vmatpush.xpose.msra.mxu0 0.0
        %835 = vmatpush.xpose.msra.mxu0 0.0
        %836 = vmatpush.xpose.msra.mxu0 0.0
        %837 = vmatpush.xpose.msra.mxu0 0.0
        %838 = vmatpush.xpose.msra.mxu0 0.0
        %839 = vmatpush.xpose.msra.mxu0 0.0
        %840 = vmatpush.xpose.msra.mxu0 0.0
        %841 = vmatpush.xpose.msra.mxu0 0.0
        %842 = vmatpush.xpose.msra.mxu0 0.0
        %843 = vmatpush.xpose.msra.mxu0 0.0
        %844 = vmatpush.xpose.msra.mxu0 0.0
        %845 = vmatpush.xpose.msra.mxu0 0.0
        %846 = vmatpush.xpose.msra.mxu0 0.0
        %847 = vmatpush.xpose.msra.mxu0 0.0
        %848 = vmatpush.xpose.msra.mxu0 0.0
        %849 = vmatpush.xpose.msra.mxu0 %v832
        %850 = vmatmul.f32.gmra.mxu0 %v830
        %v851 = vpop.f32.mrf.mxu0
        %v852 = vadd.f32 0.0, %v851
        %853 = vdwg.mxu0
        %v854 = vsel %vm337, %v852, -inf
        %855 = vmax.xlane.f32.xlu0 %v854
        %v856 = vpop.xlane.xlu0 %855
        %v857 = vsub.f32 %v852, %v856
        %v858 = vmul.f32 %v857, 1.442695
        %v859 = vpow.pop %v858
        %v860 = vsel %vm337, %v859, 0.0
        %861 = vadd.xlane.f32.xlu0 %v860
        %v862 = vpop.xlane.xlu0 %861
        %v863 = vrcp.pop %v862
        %v864 = vmul.f32 %v862, %v863
        %v865 = vsub.f32 1.0, %v864
        %v866 = vmul.f32 %v863, %v865
        %v867 = vadd.f32 %v863, %v866
        %vm868 = vweird.f32 %v862
        %vm869 = vweird.f32 %v863
        %vm870 = vmor %vm868, %vm869
        %v871 = vsel %vm870, %v863, %v867
        %v872 = vand.u32 2147483647, %v862
        %vm873 = vcmp.eq.f32.partialorder %v872, 8.507059e+37
        %v874 = vand.u32 %v862, 2147483648
        %v875 = vor.u32 1.1754944e-38, %v874
        %v876 = vsel %vm873, %v875, %v871
        %v877 = vmul.f32 %v859, %v876
        %878 = vrot.lane.b32.xlu0 %v326, 48
        %v879 = vpop.permute.xlu0 %878
        %v882 = vsel %vm337, %v877, 0
        %884 = vmatpush.msra.mxu0 0.0
        %885 = vmatpush.msra.mxu0 0.0
        %886 = vmatpush.msra.mxu0 0.0
        %887 = vmatpush.msra.mxu0 0.0
        %888 = vmatpush.msra.mxu0 0.0
        %889 = vmatpush.msra.mxu0 0.0
        %890 = vmatpush.msra.mxu0 0.0
        %891 = vmatpush.msra.mxu0 0.0
        %892 = vmatpush.msra.mxu0 0.0
        %893 = vmatpush.msra.mxu0 0.0
        %894 = vmatpush.msra.mxu0 0.0
        %895 = vmatpush.msra.mxu0 0.0
        %896 = vmatpush.msra.mxu0 0.0
        %897 = vmatpush.msra.mxu0 0.0
        %898 = vmatpush.msra.mxu0 0.0
        %899 = vmatpush.msra.mxu0 %v879
        %900 = vmatmul.f32.gmra.mxu0 %v882
        %v901 = vpop.f32.mrf.mxu0
        %v902 = vadd.f32 0.0, %v901
        %903 = vdwg.mxu0
        %905 = vrot.lane.b32.xlu0 %v902, 16
        %v906 = vpop.permute.xlu0 %905
        %908 = vst.msk [vmem:[#allocation2 + $0x8] sm:$0xff] %vm579, %v906
        %909 = vrot.lane.b32.xlu0 %v326, 104
        %v910 = vpop.permute.xlu0 %909
        %911 = vrot.lane.b32.xlu0 %v326, 72
        %v912 = vpop.permute.xlu0 %911
        %v913 = vsel %vm337, %v910, 0
        %v915 = vsel %vm337, %v912, 0
        %917 = vmatpush.xpose.msra.mxu0 0.0
        %918 = vmatpush.xpose.msra.mxu0 0.0
        %919 = vmatpush.xpose.msra.mxu0 0.0
        %920 = vmatpush.xpose.msra.mxu0 0.0
        %921 = vmatpush.xpose.msra.mxu0 0.0
        %922 = vmatpush.xpose.msra.mxu0 0.0
        %923 = vmatpush.xpose.msra.mxu0 0.0
        %924 = vmatpush.xpose.msra.mxu0 0.0
        %925 = vmatpush.xpose.msra.mxu0 0.0
        %926 = vmatpush.xpose.msra.mxu0 0.0
        %927 = vmatpush.xpose.msra.mxu0 0.0
        %928 = vmatpush.xpose.msra.mxu0 0.0
        %929 = vmatpush.xpose.msra.mxu0 0.0
        %930 = vmatpush.xpose.msra.mxu0 0.0
        %931 = vmatpush.xpose.msra.mxu0 0.0
        %932 = vmatpush.xpose.msra.mxu0 %v915
        %933 = vmatmul.f32.gmra.mxu0 %v913
        %v934 = vpop.f32.mrf.mxu0
        %v935 = vadd.f32 0.0, %v934
        %936 = vdwg.mxu0
        %v937 = vsel %vm337, %v935, -inf
        %938 = vmax.xlane.f32.xlu0 %v937
        %v939 = vpop.xlane.xlu0 %938
        %v940 = vsub.f32 %v935, %v939
        %v941 = vmul.f32 %v940, 1.442695
        %v942 = vpow.pop %v941
        %v943 = vsel %vm337, %v942, 0.0
        %944 = vadd.xlane.f32.xlu0 %v943
        %v945 = vpop.xlane.xlu0 %944
        %v946 = vrcp.pop %v945
        %v947 = vmul.f32 %v945, %v946
        %v948 = vsub.f32 1.0, %v947
        %v949 = vmul.f32 %v946, %v948
        %v950 = vadd.f32 %v946, %v949
        %vm951 = vweird.f32 %v945
        %vm952 = vweird.f32 %v946
        %vm953 = vmor %vm951, %vm952
        %v954 = vsel %vm953, %v946, %v950
        %v955 = vand.u32 2147483647, %v945
        %vm956 = vcmp.eq.f32.partialorder %v955, 8.507059e+37
        %v957 = vand.u32 %v945, 2147483648
        %v958 = vor.u32 1.1754944e-38, %v957
        %v959 = vsel %vm956, %v958, %v954
        %v960 = vmul.f32 %v942, %v959
        %961 = vrot.lane.b32.xlu0 %v326, 40
        %v962 = vpop.permute.xlu0 %961
        %v965 = vsel %vm337, %v960, 0
        %967 = vmatpush.msra.mxu0 0.0
        %968 = vmatpush.msra.mxu0 0.0
        %969 = vmatpush.msra.mxu0 0.0
        %970 = vmatpush.msra.mxu0 0.0
        %971 = vmatpush.msra.mxu0 0.0
        %972 = vmatpush.msra.mxu0 0.0
        %973 = vmatpush.msra.mxu0 0.0
        %974 = vmatpush.msra.mxu0 0.0
        %975 = vmatpush.msra.mxu0 0.0
        %976 = vmatpush.msra.mxu0 0.0
        %977 = vmatpush.msra.mxu0 0.0
        %978 = vmatpush.msra.mxu0 0.0
        %979 = vmatpush.msra.mxu0 0.0
        %980 = vmatpush.msra.mxu0 0.0
        %981 = vmatpush.msra.mxu0 0.0
        %982 = vmatpush.msra.mxu0 %v962
        %983 = vmatmul.f32.gmra.mxu0 %v965
        %v984 = vpop.f32.mrf.mxu0
        %v985 = vadd.f32 0.0, %v984
        %986 = vdwg.mxu0
        %988 = vrot.lane.b32.xlu0 %v985, 24
        %v989 = vpop.permute.xlu0 %988
        %991 = vst.msk [vmem:[#allocation2 + $0x8] sm:$0xff] %vm663, %v989
        %993 = vrot.lane.b32.xlu0 %v329, 96
        %v994 = vpop.permute.xlu0 %993
        %v995 = vsel %vm337, %v329, 0
        %v997 = vsel %vm337, %v994, 0
        %999 = vmatpush.xpose.msra.mxu0 0.0
        %1000 = vmatpush.xpose.msra.mxu0 0.0
        %1001 = vmatpush.xpose.msra.mxu0 0.0
        %1002 = vmatpush.xpose.msra.mxu0 0.0
        %1003 = vmatpush.xpose.msra.mxu0 0.0
        %1004 = vmatpush.xpose.msra.mxu0 0.0
        %1005 = vmatpush.xpose.msra.mxu0 0.0
        %1006 = vmatpush.xpose.msra.mxu0 0.0
        %1007 = vmatpush.xpose.msra.mxu0 0.0
        %1008 = vmatpush.xpose.msra.mxu0 0.0
        %1009 = vmatpush.xpose.msra.mxu0 0.0
        %1010 = vmatpush.xpose.msra.mxu0 0.0
        %1011 = vmatpush.xpose.msra.mxu0 0.0
        %1012 = vmatpush.xpose.msra.mxu0 0.0
        %1013 = vmatpush.xpose.msra.mxu0 0.0
        %1014 = vmatpush.xpose.msra.mxu0 %v997
        %1015 = vmatmul.f32.gmra.mxu0 %v995
        %v1016 = vpop.f32.mrf.mxu0
        %v1017 = vadd.f32 0.0, %v1016
        %1018 = vdwg.mxu0
        %v1019 = vsel %vm337, %v1017, -inf
        %1020 = vmax.xlane.f32.xlu0 %v1019
        %v1021 = vpop.xlane.xlu0 %1020
        %v1022 = vsub.f32 %v1017, %v1021
        %v1023 = vmul.f32 %v1022, 1.442695
        %v1024 = vpow.pop %v1023
        %v1025 = vsel %vm337, %v1024, 0.0
        %1026 = vadd.xlane.f32.xlu0 %v1025
        %v1027 = vpop.xlane.xlu0 %1026
        %v1028 = vrcp.pop %v1027
        %v1029 = vmul.f32 %v1027, %v1028
        %v1030 = vsub.f32 1.0, %v1029
        %v1031 = vmul.f32 %v1028, %v1030
        %v1032 = vadd.f32 %v1028, %v1031
        %vm1033 = vweird.f32 %v1027
        %vm1034 = vweird.f32 %v1028
        %vm1035 = vmor %vm1033, %vm1034
        %v1036 = vsel %vm1035, %v1028, %v1032
        %v1037 = vand.u32 2147483647, %v1027
        %vm1038 = vcmp.eq.f32.partialorder %v1037, 8.507059e+37
        %v1039 = vand.u32 %v1027, 2147483648
        %v1040 = vor.u32 1.1754944e-38, %v1039
        %v1041 = vsel %vm1038, %v1040, %v1036
        %v1042 = vmul.f32 %v1024, %v1041
        %1043 = vrot.lane.b32.xlu0 %v329, 64
        %v1044 = vpop.permute.xlu0 %1043
        %v1047 = vsel %vm337, %v1042, 0
        %1049 = vmatpush.msra.mxu0 0.0
        %1050 = vmatpush.msra.mxu0 0.0
        %1051 = vmatpush.msra.mxu0 0.0
        %1052 = vmatpush.msra.mxu0 0.0
        %1053 = vmatpush.msra.mxu0 0.0
        %1054 = vmatpush.msra.mxu0 0.0
        %1055 = vmatpush.msra.mxu0 0.0
        %1056 = vmatpush.msra.mxu0 0.0
        %1057 = vmatpush.msra.mxu0 0.0
        %1058 = vmatpush.msra.mxu0 0.0
        %1059 = vmatpush.msra.mxu0 0.0
        %1060 = vmatpush.msra.mxu0 0.0
        %1061 = vmatpush.msra.mxu0 0.0
        %1062 = vmatpush.msra.mxu0 0.0
        %1063 = vmatpush.msra.mxu0 0.0
        %1064 = vmatpush.msra.mxu0 %v1044
        %1065 = vmatmul.f32.gmra.mxu0 %v1047
        %v1066 = vpop.f32.mrf.mxu0
        %v1067 = vadd.f32 0.0, %v1066
        %1068 = vdwg.mxu0
        %1069 = vst.msk [vmem:[#allocation2 + $0x10] sm:$0xff] %vm337, %v1067
        %1070 = vrot.lane.b32.xlu0 %v329, 120
        %v1071 = vpop.permute.xlu0 %1070
        %1072 = vrot.lane.b32.xlu0 %v329, 88
        %v1073 = vpop.permute.xlu0 %1072
        %v1074 = vsel %vm337, %v1071, 0
        %v1076 = vsel %vm337, %v1073, 0
        %1078 = vmatpush.xpose.msra.mxu0 0.0
        %1079 = vmatpush.xpose.msra.mxu0 0.0
        %1080 = vmatpush.xpose.msra.mxu0 0.0
        %1081 = vmatpush.xpose.msra.mxu0 0.0
        %1082 = vmatpush.xpose.msra.mxu0 0.0
        %1083 = vmatpush.xpose.msra.mxu0 0.0
        %1084 = vmatpush.xpose.msra.mxu0 0.0
        %1085 = vmatpush.xpose.msra.mxu0 0.0
        %1086 = vmatpush.xpose.msra.mxu0 0.0
        %1087 = vmatpush.xpose.msra.mxu0 0.0
        %1088 = vmatpush.xpose.msra.mxu0 0.0
        %1089 = vmatpush.xpose.msra.mxu0 0.0
        %1090 = vmatpush.xpose.msra.mxu0 0.0
        %1091 = vmatpush.xpose.msra.mxu0 0.0
        %1092 = vmatpush.xpose.msra.mxu0 0.0
        %1093 = vmatpush.xpose.msra.mxu0 %v1076
        %1094 = vmatmul.f32.gmra.mxu0 %v1074
        %v1095 = vpop.f32.mrf.mxu0
        %v1096 = vadd.f32 0.0, %v1095
        %1097 = vdwg.mxu0
        %v1098 = vsel %vm337, %v1096, -inf
        %1099 = vmax.xlane.f32.xlu0 %v1098
        %v1100 = vpop.xlane.xlu0 %1099
        %v1101 = vsub.f32 %v1096, %v1100
        %v1102 = vmul.f32 %v1101, 1.442695
        %v1103 = vpow.pop %v1102
        %v1104 = vsel %vm337, %v1103, 0.0
        %1105 = vadd.xlane.f32.xlu0 %v1104
        %v1106 = vpop.xlane.xlu0 %1105
        %v1107 = vrcp.pop %v1106
        %v1108 = vmul.f32 %v1106, %v1107
        %v1109 = vsub.f32 1.0, %v1108
        %v1110 = vmul.f32 %v1107, %v1109
        %v1111 = vadd.f32 %v1107, %v1110
        %vm1112 = vweird.f32 %v1106
        %vm1113 = vweird.f32 %v1107
        %vm1114 = vmor %vm1112, %vm1113
        %v1115 = vsel %vm1114, %v1107, %v1111
        %v1116 = vand.u32 2147483647, %v1106
        %vm1117 = vcmp.eq.f32.partialorder %v1116, 8.507059e+37
        %v1118 = vand.u32 %v1106, 2147483648
        %v1119 = vor.u32 1.1754944e-38, %v1118
        %v1120 = vsel %vm1117, %v1119, %v1115
        %v1121 = vmul.f32 %v1103, %v1120
        %1122 = vrot.lane.b32.xlu0 %v329, 56
        %v1123 = vpop.permute.xlu0 %1122
        %v1126 = vsel %vm337, %v1121, 0
        %1128 = vmatpush.msra.mxu0 0.0
        %1129 = vmatpush.msra.mxu0 0.0
        %1130 = vmatpush.msra.mxu0 0.0
        %1131 = vmatpush.msra.mxu0 0.0
        %1132 = vmatpush.msra.mxu0 0.0
        %1133 = vmatpush.msra.mxu0 0.0
        %1134 = vmatpush.msra.mxu0 0.0
        %1135 = vmatpush.msra.mxu0 0.0
        %1136 = vmatpush.msra.mxu0 0.0
        %1137 = vmatpush.msra.mxu0 0.0
        %1138 = vmatpush.msra.mxu0 0.0
        %1139 = vmatpush.msra.mxu0 0.0
        %1140 = vmatpush.msra.mxu0 0.0
        %1141 = vmatpush.msra.mxu0 0.0
        %1142 = vmatpush.msra.mxu0 0.0
        %1143 = vmatpush.msra.mxu0 %v1123
        %1144 = vmatmul.f32.gmra.mxu0 %v1126
        %v1145 = vpop.f32.mrf.mxu0
        %v1146 = vadd.f32 0.0, %v1145
        %1147 = vdwg.mxu0
        %1149 = vrot.lane.b32.xlu0 %v1146, 8
        %v1150 = vpop.permute.xlu0 %1149
        %1152 = vst.msk [vmem:[#allocation2 + $0x10] sm:$0xff] %vm495, %v1150
        %1153 = vrot.lane.b32.xlu0 %v329, 112
        %v1154 = vpop.permute.xlu0 %1153
        %1155 = vrot.lane.b32.xlu0 %v329, 80
        %v1156 = vpop.permute.xlu0 %1155
        %v1157 = vsel %vm337, %v1154, 0
        %v1159 = vsel %vm337, %v1156, 0
        %1161 = vmatpush.xpose.msra.mxu0 0.0
        %1162 = vmatpush.xpose.msra.mxu0 0.0
        %1163 = vmatpush.xpose.msra.mxu0 0.0
        %1164 = vmatpush.xpose.msra.mxu0 0.0
        %1165 = vmatpush.xpose.msra.mxu0 0.0
        %1166 = vmatpush.xpose.msra.mxu0 0.0
        %1167 = vmatpush.xpose.msra.mxu0 0.0
        %1168 = vmatpush.xpose.msra.mxu0 0.0
        %1169 = vmatpush.xpose.msra.mxu0 0.0
        %1170 = vmatpush.xpose.msra.mxu0 0.0
        %1171 = vmatpush.xpose.msra.mxu0 0.0
        %1172 = vmatpush.xpose.msra.mxu0 0.0
        %1173 = vmatpush.xpose.msra.mxu0 0.0
        %1174 = vmatpush.xpose.msra.mxu0 0.0
        %1175 = vmatpush.xpose.msra.mxu0 0.0
        %1176 = vmatpush.xpose.msra.mxu0 %v1159
        %1177 = vmatmul.f32.gmra.mxu0 %v1157
        %v1178 = vpop.f32.mrf.mxu0
        %v1179 = vadd.f32 0.0, %v1178
        %1180 = vdwg.mxu0
        %v1181 = vsel %vm337, %v1179, -inf
        %1182 = vmax.xlane.f32.xlu0 %v1181
        %v1183 = vpop.xlane.xlu0 %1182
        %v1184 = vsub.f32 %v1179, %v1183
        %v1185 = vmul.f32 %v1184, 1.442695
        %v1186 = vpow.pop %v1185
        %v1187 = vsel %vm337, %v1186, 0.0
        %1188 = vadd.xlane.f32.xlu0 %v1187
        %v1189 = vpop.xlane.xlu0 %1188
        %v1190 = vrcp.pop %v1189
        %v1191 = vmul.f32 %v1189, %v1190
        %v1192 = vsub.f32 1.0, %v1191
        %v1193 = vmul.f32 %v1190, %v1192
        %v1194 = vadd.f32 %v1190, %v1193
        %vm1195 = vweird.f32 %v1189
        %vm1196 = vweird.f32 %v1190
        %vm1197 = vmor %vm1195, %vm1196
        %v1198 = vsel %vm1197, %v1190, %v1194
        %v1199 = vand.u32 2147483647, %v1189
        %vm1200 = vcmp.eq.f32.partialorder %v1199, 8.507059e+37
        %v1201 = vand.u32 %v1189, 2147483648
        %v1202 = vor.u32 1.1754944e-38, %v1201
        %v1203 = vsel %vm1200, %v1202, %v1198
        %v1204 = vmul.f32 %v1186, %v1203
        %1205 = vrot.lane.b32.xlu0 %v329, 48
        %v1206 = vpop.permute.xlu0 %1205
        %v1209 = vsel %vm337, %v1204, 0
        %1211 = vmatpush.msra.mxu0 0.0
        %1212 = vmatpush.msra.mxu0 0.0
        %1213 = vmatpush.msra.mxu0 0.0
        %1214 = vmatpush.msra.mxu0 0.0
        %1215 = vmatpush.msra.mxu0 0.0
        %1216 = vmatpush.msra.mxu0 0.0
        %1217 = vmatpush.msra.mxu0 0.0
        %1218 = vmatpush.msra.mxu0 0.0
        %1219 = vmatpush.msra.mxu0 0.0
        %1220 = vmatpush.msra.mxu0 0.0
        %1221 = vmatpush.msra.mxu0 0.0
        %1222 = vmatpush.msra.mxu0 0.0
        %1223 = vmatpush.msra.mxu0 0.0
        %1224 = vmatpush.msra.mxu0 0.0
        %1225 = vmatpush.msra.mxu0 0.0
        %1226 = vmatpush.msra.mxu0 %v1206
        %1227 = vmatmul.f32.gmra.mxu0 %v1209
        %v1228 = vpop.f32.mrf.mxu0
        %v1229 = vadd.f32 0.0, %v1228
        %1230 = vdwg.mxu0
        %1232 = vrot.lane.b32.xlu0 %v1229, 16
        %v1233 = vpop.permute.xlu0 %1232
        %1235 = vst.msk [vmem:[#allocation2 + $0x10] sm:$0xff] %vm579, %v1233
        %1236 = vrot.lane.b32.xlu0 %v329, 104
        %v1237 = vpop.permute.xlu0 %1236
        %1238 = vrot.lane.b32.xlu0 %v329, 72
        %v1239 = vpop.permute.xlu0 %1238
        %v1240 = vsel %vm337, %v1237, 0
        %v1242 = vsel %vm337, %v1239, 0
        %1244 = vmatpush.xpose.msra.mxu0 0.0
        %1245 = vmatpush.xpose.msra.mxu0 0.0
        %1246 = vmatpush.xpose.msra.mxu0 0.0
        %1247 = vmatpush.xpose.msra.mxu0 0.0
        %1248 = vmatpush.xpose.msra.mxu0 0.0
        %1249 = vmatpush.xpose.msra.mxu0 0.0
        %1250 = vmatpush.xpose.msra.mxu0 0.0
        %1251 = vmatpush.xpose.msra.mxu0 0.0
        %1252 = vmatpush.xpose.msra.mxu0 0.0
        %1253 = vmatpush.xpose.msra.mxu0 0.0
        %1254 = vmatpush.xpose.msra.mxu0 0.0
        %1255 = vmatpush.xpose.msra.mxu0 0.0
        %1256 = vmatpush.xpose.msra.mxu0 0.0
        %1257 = vmatpush.xpose.msra.mxu0 0.0
        %1258 = vmatpush.xpose.msra.mxu0 0.0
        %1259 = vmatpush.xpose.msra.mxu0 %v1242
        %1260 = vmatmul.f32.gmra.mxu0 %v1240
        %v1261 = vpop.f32.mrf.mxu0
        %v1262 = vadd.f32 0.0, %v1261
        %1263 = vdwg.mxu0
        %v1264 = vsel %vm337, %v1262, -inf
        %1265 = vmax.xlane.f32.xlu0 %v1264
        %v1266 = vpop.xlane.xlu0 %1265
        %v1267 = vsub.f32 %v1262, %v1266
        %v1268 = vmul.f32 %v1267, 1.442695
        %v1269 = vpow.pop %v1268
        %v1270 = vsel %vm337, %v1269, 0.0
        %1271 = vadd.xlane.f32.xlu0 %v1270
        %v1272 = vpop.xlane.xlu0 %1271
        %v1273 = vrcp.pop %v1272
        %v1274 = vmul.f32 %v1272, %v1273
        %v1275 = vsub.f32 1.0, %v1274
        %v1276 = vmul.f32 %v1273, %v1275
        %v1277 = vadd.f32 %v1273, %v1276
        %vm1278 = vweird.f32 %v1272
        %vm1279 = vweird.f32 %v1273
        %vm1280 = vmor %vm1278, %vm1279
        %v1281 = vsel %vm1280, %v1273, %v1277
        %v1282 = vand.u32 2147483647, %v1272
        %vm1283 = vcmp.eq.f32.partialorder %v1282, 8.507059e+37
        %v1284 = vand.u32 %v1272, 2147483648
        %v1285 = vor.u32 1.1754944e-38, %v1284
        %v1286 = vsel %vm1283, %v1285, %v1281
        %v1287 = vmul.f32 %v1269, %v1286
        %1288 = vrot.lane.b32.xlu0 %v329, 40
        %v1289 = vpop.permute.xlu0 %1288
        %v1292 = vsel %vm337, %v1287, 0
        %1294 = vmatpush.msra.mxu0 0.0
        %1295 = vmatpush.msra.mxu0 0.0
        %1296 = vmatpush.msra.mxu0 0.0
        %1297 = vmatpush.msra.mxu0 0.0
        %1298 = vmatpush.msra.mxu0 0.0
        %1299 = vmatpush.msra.mxu0 0.0
        %1300 = vmatpush.msra.mxu0 0.0
        %1301 = vmatpush.msra.mxu0 0.0
        %1302 = vmatpush.msra.mxu0 0.0
        %1303 = vmatpush.msra.mxu0 0.0
        %1304 = vmatpush.msra.mxu0 0.0
        %1305 = vmatpush.msra.mxu0 0.0
        %1306 = vmatpush.msra.mxu0 0.0
        %1307 = vmatpush.msra.mxu0 0.0
        %1308 = vmatpush.msra.mxu0 0.0
        %1309 = vmatpush.msra.mxu0 %v1289
        %1310 = vmatmul.f32.gmra.mxu0 %v1292
        %v1311 = vpop.f32.mrf.mxu0
        %v1312 = vadd.f32 0.0, %v1311
        %1313 = vdwg.mxu0
        %1315 = vrot.lane.b32.xlu0 %v1312, 24
        %v1316 = vpop.permute.xlu0 %1315
        %1318 = vst.msk [vmem:[#allocation2 + $0x10] sm:$0xff] %vm663, %v1316
        %1320 = vrot.lane.b32.xlu0 %v332, 96
        %v1321 = vpop.permute.xlu0 %1320
        %v1322 = vsel %vm337, %v332, 0
        %v1324 = vsel %vm337, %v1321, 0
        %1326 = vmatpush.xpose.msra.mxu0 0.0
        %1327 = vmatpush.xpose.msra.mxu0 0.0
        %1328 = vmatpush.xpose.msra.mxu0 0.0
        %1329 = vmatpush.xpose.msra.mxu0 0.0
        %1330 = vmatpush.xpose.msra.mxu0 0.0
        %1331 = vmatpush.xpose.msra.mxu0 0.0
        %1332 = vmatpush.xpose.msra.mxu0 0.0
        %1333 = vmatpush.xpose.msra.mxu0 0.0
        %1334 = vmatpush.xpose.msra.mxu0 0.0
        %1335 = vmatpush.xpose.msra.mxu0 0.0
        %1336 = vmatpush.xpose.msra.mxu0 0.0
        %1337 = vmatpush.xpose.msra.mxu0 0.0
        %1338 = vmatpush.xpose.msra.mxu0 0.0
        %1339 = vmatpush.xpose.msra.mxu0 0.0
        %1340 = vmatpush.xpose.msra.mxu0 0.0
        %1341 = vmatpush.xpose.msra.mxu0 %v1324
        %1342 = vmatmul.f32.gmra.mxu0 %v1322
        %v1343 = vpop.f32.mrf.mxu0
        %v1344 = vadd.f32 0.0, %v1343
        %1345 = vdwg.mxu0
        %v1346 = vsel %vm337, %v1344, -inf
        %1347 = vmax.xlane.f32.xlu0 %v1346
        %v1348 = vpop.xlane.xlu0 %1347
        %v1349 = vsub.f32 %v1344, %v1348
        %v1350 = vmul.f32 %v1349, 1.442695
        %v1351 = vpow.pop %v1350
        %v1352 = vsel %vm337, %v1351, 0.0
        %1353 = vadd.xlane.f32.xlu0 %v1352
        %v1354 = vpop.xlane.xlu0 %1353
        %v1355 = vrcp.pop %v1354
        %v1356 = vmul.f32 %v1354, %v1355
        %v1357 = vsub.f32 1.0, %v1356
        %v1358 = vmul.f32 %v1355, %v1357
        %v1359 = vadd.f32 %v1355, %v1358
        %vm1360 = vweird.f32 %v1354
        %vm1361 = vweird.f32 %v1355
        %vm1362 = vmor %vm1360, %vm1361
        %v1363 = vsel %vm1362, %v1355, %v1359
        %v1364 = vand.u32 2147483647, %v1354
        %vm1365 = vcmp.eq.f32.partialorder %v1364, 8.507059e+37
        %v1366 = vand.u32 %v1354, 2147483648
        %v1367 = vor.u32 1.1754944e-38, %v1366
        %v1368 = vsel %vm1365, %v1367, %v1363
        %v1369 = vmul.f32 %v1351, %v1368
        %1370 = vrot.lane.b32.xlu0 %v332, 64
        %v1371 = vpop.permute.xlu0 %1370
        %v1374 = vsel %vm337, %v1369, 0
        %1376 = vmatpush.msra.mxu0 0.0
        %1377 = vmatpush.msra.mxu0 0.0
        %1378 = vmatpush.msra.mxu0 0.0
        %1379 = vmatpush.msra.mxu0 0.0
        %1380 = vmatpush.msra.mxu0 0.0
        %1381 = vmatpush.msra.mxu0 0.0
        %1382 = vmatpush.msra.mxu0 0.0
        %1383 = vmatpush.msra.mxu0 0.0
        %1384 = vmatpush.msra.mxu0 0.0
        %1385 = vmatpush.msra.mxu0 0.0
        %1386 = vmatpush.msra.mxu0 0.0
        %1387 = vmatpush.msra.mxu0 0.0
        %1388 = vmatpush.msra.mxu0 0.0
        %1389 = vmatpush.msra.mxu0 0.0
        %1390 = vmatpush.msra.mxu0 0.0
        %1391 = vmatpush.msra.mxu0 %v1371
        %1392 = vmatmul.f32.gmra.mxu0 %v1374
        %v1393 = vpop.f32.mrf.mxu0
        %v1394 = vadd.f32 0.0, %v1393
        %1395 = vdwg.mxu0
        %1396 = vst.msk [vmem:[#allocation2 + $0x18] sm:$0xff] %vm337, %v1394
        %1397 = vrot.lane.b32.xlu0 %v332, 120
        %v1398 = vpop.permute.xlu0 %1397
        %1399 = vrot.lane.b32.xlu0 %v332, 88
        %v1400 = vpop.permute.xlu0 %1399
        %v1401 = vsel %vm337, %v1398, 0
        %v1403 = vsel %vm337, %v1400, 0
        %1405 = vmatpush.xpose.msra.mxu0 0.0
        %1406 = vmatpush.xpose.msra.mxu0 0.0
        %1407 = vmatpush.xpose.msra.mxu0 0.0
        %1408 = vmatpush.xpose.msra.mxu0 0.0
        %1409 = vmatpush.xpose.msra.mxu0 0.0
        %1410 = vmatpush.xpose.msra.mxu0 0.0
        %1411 = vmatpush.xpose.msra.mxu0 0.0
        %1412 = vmatpush.xpose.msra.mxu0 0.0
        %1413 = vmatpush.xpose.msra.mxu0 0.0
        %1414 = vmatpush.xpose.msra.mxu0 0.0
        %1415 = vmatpush.xpose.msra.mxu0 0.0
        %1416 = vmatpush.xpose.msra.mxu0 0.0
        %1417 = vmatpush.xpose.msra.mxu0 0.0
        %1418 = vmatpush.xpose.msra.mxu0 0.0
        %1419 = vmatpush.xpose.msra.mxu0 0.0
        %1420 = vmatpush.xpose.msra.mxu0 %v1403
        %1421 = vmatmul.f32.gmra.mxu0 %v1401
        %v1422 = vpop.f32.mrf.mxu0
        %v1423 = vadd.f32 0.0, %v1422
        %1424 = vdwg.mxu0
        %v1425 = vsel %vm337, %v1423, -inf
        %1426 = vmax.xlane.f32.xlu0 %v1425
        %v1427 = vpop.xlane.xlu0 %1426
        %v1428 = vsub.f32 %v1423, %v1427
        %v1429 = vmul.f32 %v1428, 1.442695
        %v1430 = vpow.pop %v1429
        %v1431 = vsel %vm337, %v1430, 0.0
        %1432 = vadd.xlane.f32.xlu0 %v1431
        %v1433 = vpop.xlane.xlu0 %1432
        %v1434 = vrcp.pop %v1433
        %v1435 = vmul.f32 %v1433, %v1434
        %v1436 = vsub.f32 1.0, %v1435
        %v1437 = vmul.f32 %v1434, %v1436
        %v1438 = vadd.f32 %v1434, %v1437
        %vm1439 = vweird.f32 %v1433
        %vm1440 = vweird.f32 %v1434
        %vm1441 = vmor %vm1439, %vm1440
        %v1442 = vsel %vm1441, %v1434, %v1438
        %v1443 = vand.u32 2147483647, %v1433
        %vm1444 = vcmp.eq.f32.partialorder %v1443, 8.507059e+37
        %v1445 = vand.u32 %v1433, 2147483648
        %v1446 = vor.u32 1.1754944e-38, %v1445
        %v1447 = vsel %vm1444, %v1446, %v1442
        %v1448 = vmul.f32 %v1430, %v1447
        %1449 = vrot.lane.b32.xlu0 %v332, 56
        %v1450 = vpop.permute.xlu0 %1449
        %v1453 = vsel %vm337, %v1448, 0
        %1455 = vmatpush.msra.mxu0 0.0
        %1456 = vmatpush.msra.mxu0 0.0
        %1457 = vmatpush.msra.mxu0 0.0
        %1458 = vmatpush.msra.mxu0 0.0
        %1459 = vmatpush.msra.mxu0 0.0
        %1460 = vmatpush.msra.mxu0 0.0
        %1461 = vmatpush.msra.mxu0 0.0
        %1462 = vmatpush.msra.mxu0 0.0
        %1463 = vmatpush.msra.mxu0 0.0
        %1464 = vmatpush.msra.mxu0 0.0
        %1465 = vmatpush.msra.mxu0 0.0
        %1466 = vmatpush.msra.mxu0 0.0
        %1467 = vmatpush.msra.mxu0 0.0
        %1468 = vmatpush.msra.mxu0 0.0
        %1469 = vmatpush.msra.mxu0 0.0
        %1470 = vmatpush.msra.mxu0 %v1450
        %1471 = vmatmul.f32.gmra.mxu0 %v1453
        %v1472 = vpop.f32.mrf.mxu0
        %v1473 = vadd.f32 0.0, %v1472
        %1474 = vdwg.mxu0
        %1476 = vrot.lane.b32.xlu0 %v1473, 8
        %v1477 = vpop.permute.xlu0 %1476
        %1479 = vst.msk [vmem:[#allocation2 + $0x18] sm:$0xff] %vm495, %v1477
        %1480 = vrot.lane.b32.xlu0 %v332, 112
        %v1481 = vpop.permute.xlu0 %1480
        %1482 = vrot.lane.b32.xlu0 %v332, 80
        %v1483 = vpop.permute.xlu0 %1482
        %v1484 = vsel %vm337, %v1481, 0
        %v1486 = vsel %vm337, %v1483, 0
        %1488 = vmatpush.xpose.msra.mxu0 0.0
        %1489 = vmatpush.xpose.msra.mxu0 0.0
        %1490 = vmatpush.xpose.msra.mxu0 0.0
        %1491 = vmatpush.xpose.msra.mxu0 0.0
        %1492 = vmatpush.xpose.msra.mxu0 0.0
        %1493 = vmatpush.xpose.msra.mxu0 0.0
        %1494 = vmatpush.xpose.msra.mxu0 0.0
        %1495 = vmatpush.xpose.msra.mxu0 0.0
        %1496 = vmatpush.xpose.msra.mxu0 0.0
        %1497 = vmatpush.xpose.msra.mxu0 0.0
        %1498 = vmatpush.xpose.msra.mxu0 0.0
        %1499 = vmatpush.xpose.msra.mxu0 0.0
        %1500 = vmatpush.xpose.msra.mxu0 0.0
        %1501 = vmatpush.xpose.msra.mxu0 0.0
        %1502 = vmatpush.xpose.msra.mxu0 0.0
        %1503 = vmatpush.xpose.msra.mxu0 %v1486
        %1504 = vmatmul.f32.gmra.mxu0 %v1484
        %v1505 = vpop.f32.mrf.mxu0
        %v1506 = vadd.f32 0.0, %v1505
        %1507 = vdwg.mxu0
        %v1508 = vsel %vm337, %v1506, -inf
        %1509 = vmax.xlane.f32.xlu0 %v1508
        %v1510 = vpop.xlane.xlu0 %1509
        %v1511 = vsub.f32 %v1506, %v1510
        %v1512 = vmul.f32 %v1511, 1.442695
        %v1513 = vpow.pop %v1512
        %v1514 = vsel %vm337, %v1513, 0.0
        %1515 = vadd.xlane.f32.xlu0 %v1514
        %v1516 = vpop.xlane.xlu0 %1515
        %v1517 = vrcp.pop %v1516
        %v1518 = vmul.f32 %v1516, %v1517
        %v1519 = vsub.f32 1.0, %v1518
        %v1520 = vmul.f32 %v1517, %v1519
        %v1521 = vadd.f32 %v1517, %v1520
        %vm1522 = vweird.f32 %v1516
        %vm1523 = vweird.f32 %v1517
        %vm1524 = vmor %vm1522, %vm1523
        %v1525 = vsel %vm1524, %v1517, %v1521
        %v1526 = vand.u32 2147483647, %v1516
        %vm1527 = vcmp.eq.f32.partialorder %v1526, 8.507059e+37
        %v1528 = vand.u32 %v1516, 2147483648
        %v1529 = vor.u32 1.1754944e-38, %v1528
        %v1530 = vsel %vm1527, %v1529, %v1525
        %v1531 = vmul.f32 %v1513, %v1530
        %1532 = vrot.lane.b32.xlu0 %v332, 48
        %v1533 = vpop.permute.xlu0 %1532
        %v1536 = vsel %vm337, %v1531, 0
        %1538 = vmatpush.msra.mxu0 0.0
        %1539 = vmatpush.msra.mxu0 0.0
        %1540 = vmatpush.msra.mxu0 0.0
        %1541 = vmatpush.msra.mxu0 0.0
        %1542 = vmatpush.msra.mxu0 0.0
        %1543 = vmatpush.msra.mxu0 0.0
        %1544 = vmatpush.msra.mxu0 0.0
        %1545 = vmatpush.msra.mxu0 0.0
        %1546 = vmatpush.msra.mxu0 0.0
        %1547 = vmatpush.msra.mxu0 0.0
        %1548 = vmatpush.msra.mxu0 0.0
        %1549 = vmatpush.msra.mxu0 0.0
        %1550 = vmatpush.msra.mxu0 0.0
        %1551 = vmatpush.msra.mxu0 0.0
        %1552 = vmatpush.msra.mxu0 0.0
        %1553 = vmatpush.msra.mxu0 %v1533
        %1554 = vmatmul.f32.gmra.mxu0 %v1536
        %v1555 = vpop.f32.mrf.mxu0
        %v1556 = vadd.f32 0.0, %v1555
        %1557 = vdwg.mxu0
        %1559 = vrot.lane.b32.xlu0 %v1556, 16
        %v1560 = vpop.permute.xlu0 %1559
        %1562 = vst.msk [vmem:[#allocation2 + $0x18] sm:$0xff] %vm579, %v1560
        %1563 = vrot.lane.b32.xlu0 %v332, 104
        %v1564 = vpop.permute.xlu0 %1563
        %1565 = vrot.lane.b32.xlu0 %v332, 72
        %v1566 = vpop.permute.xlu0 %1565
        %v1567 = vsel %vm337, %v1564, 0
        %v1569 = vsel %vm337, %v1566, 0
        %1571 = vmatpush.xpose.msra.mxu0 0.0
        %1572 = vmatpush.xpose.msra.mxu0 0.0
        %1573 = vmatpush.xpose.msra.mxu0 0.0
        %1574 = vmatpush.xpose.msra.mxu0 0.0
        %1575 = vmatpush.xpose.msra.mxu0 0.0
        %1576 = vmatpush.xpose.msra.mxu0 0.0
        %1577 = vmatpush.xpose.msra.mxu0 0.0
        %1578 = vmatpush.xpose.msra.mxu0 0.0
        %1579 = vmatpush.xpose.msra.mxu0 0.0
        %1580 = vmatpush.xpose.msra.mxu0 0.0
        %1581 = vmatpush.xpose.msra.mxu0 0.0
        %1582 = vmatpush.xpose.msra.mxu0 0.0
        %1583 = vmatpush.xpose.msra.mxu0 0.0
        %1584 = vmatpush.xpose.msra.mxu0 0.0
        %1585 = vmatpush.xpose.msra.mxu0 0.0
        %1586 = vmatpush.xpose.msra.mxu0 %v1569
        %1587 = vmatmul.f32.gmra.mxu0 %v1567
        %v1588 = vpop.f32.mrf.mxu0
        %v1589 = vadd.f32 0.0, %v1588
        %1590 = vdwg.mxu0
        %v1591 = vsel %vm337, %v1589, -inf
        %1592 = vmax.xlane.f32.xlu0 %v1591
        %v1593 = vpop.xlane.xlu0 %1592
        %v1594 = vsub.f32 %v1589, %v1593
        %v1595 = vmul.f32 %v1594, 1.442695
        %v1596 = vpow.pop %v1595
        %v1597 = vsel %vm337, %v1596, 0.0
        %1598 = vadd.xlane.f32.xlu0 %v1597
        %v1599 = vpop.xlane.xlu0 %1598
        %v1600 = vrcp.pop %v1599
        %v1601 = vmul.f32 %v1599, %v1600
        %v1602 = vsub.f32 1.0, %v1601
        %v1603 = vmul.f32 %v1600, %v1602
        %v1604 = vadd.f32 %v1600, %v1603
        %vm1605 = vweird.f32 %v1599
        %vm1606 = vweird.f32 %v1600
        %vm1607 = vmor %vm1605, %vm1606
        %v1608 = vsel %vm1607, %v1600, %v1604
        %v1609 = vand.u32 2147483647, %v1599
        %vm1610 = vcmp.eq.f32.partialorder %v1609, 8.507059e+37
        %v1611 = vand.u32 %v1599, 2147483648
        %v1612 = vor.u32 1.1754944e-38, %v1611
        %v1613 = vsel %vm1610, %v1612, %v1608
        %v1614 = vmul.f32 %v1596, %v1613
        %1615 = vrot.lane.b32.xlu0 %v332, 40
        %v1616 = vpop.permute.xlu0 %1615
        %v1619 = vsel %vm337, %v1614, 0
        %1621 = vmatpush.msra.mxu0 0.0
        %1622 = vmatpush.msra.mxu0 0.0
        %1623 = vmatpush.msra.mxu0 0.0
        %1624 = vmatpush.msra.mxu0 0.0
        %1625 = vmatpush.msra.mxu0 0.0
        %1626 = vmatpush.msra.mxu0 0.0
        %1627 = vmatpush.msra.mxu0 0.0
        %1628 = vmatpush.msra.mxu0 0.0
        %1629 = vmatpush.msra.mxu0 0.0
        %1630 = vmatpush.msra.mxu0 0.0
        %1631 = vmatpush.msra.mxu0 0.0
        %1632 = vmatpush.msra.mxu0 0.0
        %1633 = vmatpush.msra.mxu0 0.0
        %1634 = vmatpush.msra.mxu0 0.0
        %1635 = vmatpush.msra.mxu0 0.0
        %1636 = vmatpush.msra.mxu0 %v1616
        %1637 = vmatmul.f32.gmra.mxu0 %v1619
        %v1638 = vpop.f32.mrf.mxu0
        %v1639 = vadd.f32 0.0, %v1638
        %1640 = vdwg.mxu0
        %1642 = vrot.lane.b32.xlu0 %v1639, 24
        %v1643 = vpop.permute.xlu0 %1642
        %1645 = vst.msk [vmem:[#allocation2 + $0x18] sm:$0xff] %vm663, %v1643
        %v1646 = vld [vmem:[#allocation2] sm:$0xff]
        %v1647 = vld [vmem:[#allocation2 + $0x8] sm:$0xff]
        %v1648 = vld [vmem:[#allocation2 + $0x10] sm:$0xff]
        %v1649 = vld [vmem:[#allocation2 + $0x18] sm:$0xff]
        %v1650 = vld [vmem:[#allocation8] sm:$0xff]
        %v1651 = vld [vmem:[#allocation8 + $0x8] sm:$0xff]
        %v1652 = vld [vmem:[#allocation8 + $0x10] sm:$0xff]
        %v1653 = vld [vmem:[#allocation8 + $0x18] sm:$0xff]
        %v1654 = vld [vmem:[%s4] sm:$0x1]
        %v1656 = vperm.slane %v1654, 0
        %v1659 = vsel %vm292, %v1646, 0
        %v1662 = vsel %vm292, %v1647, 0
        %v1665 = vsel %vm292, %v1648, 0
        %v1668 = vsel %vm292, %v1649, 0
        %1670 = vmatpush.msra.mxu0 0.0
        %1671 = vmatpush.msra.mxu0 0.0
        %1672 = vmatpush.msra.mxu0 0.0
        %1673 = vmatpush.msra.mxu0 0.0
        %1674 = vmatpush.msra.mxu0 0.0
        %1675 = vmatpush.msra.mxu0 0.0
        %1676 = vmatpush.msra.mxu0 0.0
        %1677 = vmatpush.msra.mxu0 0.0
        %1678 = vmatpush.msra.mxu0 0.0
        %1679 = vmatpush.msra.mxu0 0.0
        %1680 = vmatpush.msra.mxu0 0.0
        %1681 = vmatpush.msra.mxu0 0.0
        %1682 = vmatpush.msra.mxu0 %v1653
        %1683 = vmatpush.msra.mxu0 %v1652
        %1684 = vmatpush.msra.mxu0 %v1651
        %1685 = vmatpush.msra.mxu0 %v1650
        %1686 = vmatmul.f32.gmra.mxu0 %v1659
        %v1687 = vpop.f32.mrf.mxu0
        %v1688 = vadd.f32 %v1656, %v1687
        %1689 = vmatmul.f32.gmra.mxu0 %v1662
        %v1690 = vpop.f32.mrf.mxu0
        %v1691 = vadd.f32 %v1656, %v1690
        %1692 = vmatmul.f32.gmra.mxu0 %v1665
        %v1693 = vpop.f32.mrf.mxu0
        %v1694 = vadd.f32 %v1656, %v1693
        %1695 = vmatmul.f32.gmra.mxu0 %v1668
        %v1696 = vpop.f32.mrf.mxu0
        %v1697 = vadd.f32 %v1656, %v1696
        %1698 = vdwg.mxu0
        %1699 = vst.msk [vmem:[%s277] sm:$0xff] %vm292, %v1688
        %1700 = vst.msk [vmem:[%s277 + $0x8] sm:$0xff] %vm292, %v1691
        %1701 = vst.msk [vmem:[%s277 + $0x10] sm:$0xff] %vm292, %v1694
        %1702 = vst.msk [vmem:[%s277 + $0x18] sm:$0xff] %vm292, %v1697
        %s1703 = sand.u32 %s141, 1
        %s1704 = scalar_lea.sflag [#allocation5], %s1703
        %s1705 = sand.u32 %s141, 1
        %s1706 = smul.addr %s1705, 32
        %s1707 = scalar_lea.vmem [#allocation9], %s1706
        // Predicated region
        $region53: #{tpu_custom_call.1} parent=39 // pred_check
          %p1708 = pneg %p151
        $region54: #{tpu_custom_call.1} parent=39 // pred_check_branch
          %1710 = sbr.rel (%p1708) target = $region56
        $region55: #{tpu_custom_call.1} parent=39 // pred_region
          %s1711 = smul.u32 4, %s23
          %1713 = vsyncadd %s1704, 0
          %s1714 = smul.addr %s1711, 8
          %s1715 = scalar_lea.hbm %s5, %s1714
          %s1716 = sshll.u32 %s1707, 4
          %s1717 = int_to_ptr.vmem [resolvable:$true] %s1716
          %s1718 = sshll.u32 %s1715, 4
          %s1719 = int_to_ptr.hbm [resolvable:$true] %s1718
          %1724 = dma.vmem_to_hbm [thread:$0]  %s1717, 512, %s1719, %s1704, 128, 128, 8
        $region56: #{tpu_custom_call.1} parent=39 // pred_fallthru
          _
      $region40: #{tpu_custom_call.1} parent=5 // pred_fallthru
        _
      %p1725 = scmp.le.s32.totalorder 2, %s18
      // Predicated region
      $region57: #{tpu_custom_call.1} parent=5 // pred_check
        %p1726 = pneg %p1725
      $region58: #{tpu_custom_call.1} parent=5 // pred_check_branch
        %1728 = sbr.rel (%p1726) target = $region60
      $region59: #{tpu_custom_call.1} parent=5 // pred_region
        %s1729 = ssub.s32 %s18, 2
        // Predicated region
        $region61: #{tpu_custom_call.1} parent=59 // pred_check
          %p1730 = pneg %p157
        $region62: #{tpu_custom_call.1} parent=59 // pred_check_branch
          %1732 = sbr.rel (%p1730) target = $region64
        $region63: #{tpu_custom_call.1} parent=59 // pred_region
          %s1733 = sand.u32 %s142, 1
          %s1734 = scalar_lea.sflag [#allocation5], %s1733
          %s1735 = sand.u32 %s142, 1
          %s1736 = smul.addr %s1735, 32
          %s1737 = scalar_lea.vmem [#allocation9], %s1736
          %1739 = dma.done %s1734, 512
        $region64: #{tpu_custom_call.1} parent=59 // pred_fallthru
          _
      $region60: #{tpu_custom_call.1} parent=5 // pred_fallthru
        _
    $region6: #{tpu_custom_call.1} parent=1 // loop_footer
      %s22 = sadd.s32 1, %s18
    $region7: #{tpu_custom_call.1} parent=1 // loop_footer_branch
      %17 = sbr.rel target = $region3
    $region8: #{tpu_custom_call.1} parent=1 // loop_exit
      _
    %1740 = vsyncpa [#allocation4], 1
    %s1741 = scalar_lea.sflag [#allocation4], 1
    %1742 = vsyncpa %s1741, 1
    %1743 = vsyncpa [#allocation7], 1
    %1744 = vsyncpa [#allocation5], 1
    %s1745 = scalar_lea.sflag [#allocation5], 1
    %1746 = vsyncpa %s1745, 1

</llo_original>
